<compile_context>
chip_gen: v7x
topology: tpu7x:2x2x1
jax: 0.10.0
libtpu: 0.0.40
codegen_flags: <defaults>
</compile_context>

<pallas_src>
import functools
import itertools

import numpy as np
import jax
import jax.numpy as jnp
from jax.experimental import pallas as pl
from jax.experimental.pallas import tpu as pltpu


# ----------------------------------------------------------------------------
# Generation-aware VMEM / tile configuration
# ----------------------------------------------------------------------------
_DEFAULT_VMEM = 64 * 1024 * 1024  # assume the smallest (v7x per-TC) if unknown
try:
    _VMEM_BYTES = int(getattr(pltpu.get_tpu_info(), "vmem_capacity_bytes", _DEFAULT_VMEM))
    if _VMEM_BYTES <= 0:
        _VMEM_BYTES = _DEFAULT_VMEM
except Exception:  # pragma: no cover - be robust to API differences
    _VMEM_BYTES = _DEFAULT_VMEM

# Leave headroom; never exceed physical VMEM (v7x = 64 MiB per TensorCore).
_VMEM_LIMIT = int(min(96 * 1024 * 1024, (3 * _VMEM_BYTES) // 4))


def _round_up(x, m):
    return ((x + m - 1) // m) * m


def _pick_col_tile(n):
    for t in (512, 256, 128):
        if n % t == 0:
            return t
    return n  # small widths (e.g. 64) use the full dim


def _pick_row_tile(m, k, tn, has_res, out_bytes):
    """Largest row tile (multiple of 8, or full M) that fits the VMEM budget."""
    budget = (2 * _VMEM_LIMIT) // 3

    def fits(tm):
        b = 2 * tm * k * 2           # x tile (bf16, double-buffered)
        b += 2 * k * tn * 2          # weight tile
        b += 2 * tm * tn * out_bytes  # output tile
        if has_res:
            b += 2 * tm * tn * 2     # residual tile
        return b <= budget

    if m <= 1024 and fits(m):
        return m
    for cand in (1024, 512, 256, 128, 64, 32, 16, 8):
        if cand < m and fits(cand):
            return cand
    return 8


def _pick_band(ho):
    """Row band for the fused 3x3 conv: a divisor of Ho, kept small enough that
    the halo buffer / accumulator stay tiny and the grid has >= 2 steps."""
    best = 1
    for cand in range(1, min(ho, 16) + 1):
        if ho % cand == 0:
            best = cand
    if ho // best < 2 and ho % 2 == 0:
        best = ho // 2
    return best


# ----------------------------------------------------------------------------
# Pallas kernels
# ----------------------------------------------------------------------------
def _mm_epilogue_kernel(*refs, act, has_residual):
    """out = act((x @ w) * scale + bias [+ residual]); f32 accumulate/epilogue."""
    if has_residual:
        x_ref, w_ref, s_ref, b_ref, r_ref, o_ref = refs
    else:
        x_ref, w_ref, s_ref, b_ref, o_ref = refs
        r_ref = None
    out = jnp.dot(x_ref[...], w_ref[...], preferred_element_type=jnp.float32)
    out = out * s_ref[...] + b_ref[...]
    if has_residual:
        out = out + r_ref[...].astype(jnp.float32)
    if act == "relu":
        out = jnp.maximum(out, 0.0)
    elif act == "sigmoid":
        out = jax.nn.sigmoid(out)
    o_ref[...] = out.astype(o_ref.dtype)


def _fused3x3_kernel(x_hbm, w_ref, s_ref, b_ref, o_ref, xbuf, acc, sem,
                     *, th, wo, wo8, act):
    """Fused 3x3/stride-1/pad-1 conv + BN + act over one (image, row-band).

    x_hbm: full padded input (N, Ho+2, Wo8+2, Cin) resident in HBM (pl.ANY).
    Per grid step we DMA a (th+2, Wo8+2, Cin) band into VMEM and accumulate the
    nine shifted taps into a f32 scratch; scale/bias/act in the epilogue.
    """
    n = pl.program_id(0)
    hb = pl.program_id(1)
    cp = pltpu.make_async_copy(
        x_hbm.at[n, pl.ds(hb * th, th + 2), :, :], xbuf, sem)
    cp.start()
    cp.wait()

    cin = xbuf.shape[-1]
    acc[...] = jnp.zeros_like(acc)
    for t in range(9):
        dh, dw = divmod(t, 3)
        tap = xbuf[dh:dh + th, dw:dw + wo8, :].reshape(th * wo8, cin)
        acc[...] += jnp.dot(tap, w_ref[t], preferred_element_type=jnp.float32)

    out = acc[...] * s_ref[...] + b_ref[...]
    if act == "relu":
        out = jnp.maximum(out, 0.0)
    out = out.reshape(th, wo8, -1)
    if wo != wo8:
        out = out[:, :wo, :]
    o_ref[...] = out.astype(o_ref.dtype)


def _gap_fc_sigmoid_kernel(x_ref, w_ref, b_ref, o_ref):
    """Global average pool (f32) fused with fc + sigmoid."""
    feat = jnp.mean(x_ref[...].astype(jnp.float32), axis=1)            # (N, C)
    logits = jnp.dot(feat.astype(jnp.bfloat16), w_ref[...],
                     preferred_element_type=jnp.float32) + b_ref[...]
    o_ref[...] = jax.nn.sigmoid(logits)


# ----------------------------------------------------------------------------
# Pallas wrappers
# ----------------------------------------------------------------------------
def matmul_scale_bias_act(x, w, scale, bias, residual=None, act="none",
                          out_dtype=jnp.bfloat16):
    """act((x @ w) * scale + bias [+ residual]) with bf16 MXU inputs.

    x: (M, K), w: (K, N) pre-laid-out bf16, scale/bias: (1, N) f32.
    No row padding: the grid uses pl.cdiv and Pallas masks the ragged tile.
    Grid order is (cols, rows) so the weight tile stays resident across rows.
    """
    M, K = x.shape
    _, N = w.shape
    out_bytes = jnp.dtype(out_dtype).itemsize
    tn = _pick_col_tile(N)
    tm = _pick_row_tile(M, K, tn, residual is not None, out_bytes)
    n_row = pl.cdiv(M, tm)
    # Ensure >= 2 grid steps so both v7x TensorCores get work on late layers.
    if n_row * (N // tn) < 2 and N % 128 == 0 and N >= 256:
        tn = 128
    n_col = N // tn

    x = x.astype(jnp.bfloat16)
    w = w.astype(jnp.bfloat16)
    scale2 = scale.reshape(1, N).astype(jnp.float32)
    bias2 = bias.reshape(1, N).astype(jnp.float32)

    in_specs = [
        pl.BlockSpec((tm, K), lambda j, i: (i, 0)),
        pl.BlockSpec((K, tn), lambda j, i: (0, j)),
        pl.BlockSpec((1, tn), lambda j, i: (0, j)),
        pl.BlockSpec((1, tn), lambda j, i: (0, j)),
    ]
    args = [x, w, scale2, bias2]
    if residual is not None:
        in_specs.append(pl.BlockSpec((tm, tn), lambda j, i: (i, j)))
        args.append(residual.astype(jnp.bfloat16))

    kernel = functools.partial(_mm_epilogue_kernel, act=act,
                               has_residual=residual is not None)
    return pl.pallas_call(
        kernel,
        out_shape=jax.ShapeDtypeStruct((M, N), out_dtype),
        grid=(n_col, n_row),
        in_specs=in_specs,
        out_specs=pl.BlockSpec((tm, tn), lambda j, i: (i, j)),
        compiler_params=pltpu.CompilerParams(
            dimension_semantics=("parallel", "parallel"),
            vmem_limit_bytes=_VMEM_LIMIT,
        ),
    )(*args)


@functools.partial(jax.jit, static_argnames=("stride", "act"))
def conv1x1_bn_act(x, w, scale, bias, residual=None, *, stride=1, act="relu"):
    """1x1 Conv2d(bias=False) + folded BN + optional residual + act (NHWC)."""
    if stride > 1:
        x = x[:, ::stride, ::stride, :]
    N, Ho, Wo, Cin = x.shape
    Cout = w.shape[1]
    xm = x.reshape(N * Ho * Wo, Cin)
    rm = None if residual is None else residual.reshape(N * Ho * Wo, Cout)
    out = matmul_scale_bias_act(xm, w, scale, bias, residual=rm, act=act)
    return out.reshape(N, Ho, Wo, Cout)


@functools.partial(jax.jit, static_argnames=("act",))
def conv3x3_bn_act_fused(x, w_taps, scale, bias, *, act="relu"):
    """Fused 3x3 stride-1 pad-1 conv + BN + act, no im2col materialization.

    x: (N, H, W, Cin) bf16.  w_taps: (9, Cin, Cout) bf16 pre-laid-out.
    """
    N, H, W, Cin = x.shape
    Cout = w_taps.shape[2]
    Ho, Wo = H, W
    Wo8 = _round_up(Wo, 8)
    # Zero-pad: 1 halo row/col on each side, plus width padding up to Wo8.
    xp = jnp.pad(x, ((0, 0), (1, 1), (1, 1 + Wo8 - Wo), (0, 0))).astype(jnp.bfloat16)
    th = _pick_band(Ho)
    bh = th + 2

    kernel = functools.partial(_fused3x3_kernel, th=th, wo=Wo, wo8=Wo8, act=act)
    return pl.pallas_call(
        kernel,
        out_shape=jax.ShapeDtypeStruct((N, Ho, Wo, Cout), jnp.bfloat16),
        grid=(N, Ho // th),
        in_specs=[
            pl.BlockSpec(memory_space=pl.ANY),                       # padded x in HBM
            pl.BlockSpec((9, Cin, Cout), lambda n, h: (0, 0, 0)),    # taps resident
            pl.BlockSpec((1, Cout), lambda n, h: (0, 0)),
            pl.BlockSpec((1, Cout), lambda n, h: (0, 0)),
        ],
        out_specs=pl.BlockSpec((None, th, Wo, Cout), lambda n, h: (n, h, 0, 0)),
        scratch_shapes=[
            pltpu.VMEM((bh, Wo8 + 2, Cin), jnp.bfloat16),
            pltpu.VMEM((th * Wo8, Cout), jnp.float32),
            pltpu.SemaphoreType.DMA,
        ],
        compiler_params=pltpu.CompilerParams(
            dimension_semantics=("parallel", "parallel"),
            vmem_limit_bytes=_VMEM_LIMIT,
        ),
    )(xp, w_taps, scale, bias)


@functools.partial(jax.jit, static_argnames=("kh", "kw", "stride", "padding", "act"))
def conv_im2col_bn_act(x, w, scale, bias, *, kh, kw, stride, padding, act):
    """Conv2d(bias=False) + folded BN + act via im2col + fused matmul kernel.

    Only used for the 7x7 stem and the 3 stride-2 3x3 convs.
    TODO(synk): fold these remaining cases into the halo-band fused kernel too.
    """
    N, H, W, Cin = x.shape
    Cout = w.shape[1]
    Ho = (H + 2 * padding - kh) // stride + 1
    Wo = (W + 2 * padding - kw) // stride + 1
    xp = jnp.pad(x, ((0, 0), (padding, padding), (padding, padding), (0, 0)))
    cols = [
        xp[:, dh: dh + stride * Ho: stride, dw: dw + stride * Wo: stride, :]
        for dh in range(kh)
        for dw in range(kw)
    ]
    # feature order (Cin, kh, kw) matches the pre-laid-out weight.
    patches = jnp.stack(cols, axis=-1).reshape(N * Ho * Wo, Cin * kh * kw)
    out = matmul_scale_bias_act(patches, w, scale, bias, act=act)
    return out.reshape(N, Ho, Wo, Cout)


@jax.jit
def maxpool_3x3_s2_p1(x):
    """MaxPool2d(kernel_size=3, stride=2, padding=1) in NHWC.

    Plain-JAX maximum reduction tree over the 9 strided taps (XLA fuses; no
    (9, M, C) stack is materialized in HBM), per the performance review.
    """
    N, H, W, C = x.shape
    Ho = (H + 2 - 3) // 2 + 1
    Wo = (W + 2 - 3) // 2 + 1
    neg = jnp.array(-jnp.inf, x.dtype)
    xp = jnp.pad(x, ((0, 0), (1, 1), (1, 1), (0, 0)), constant_values=neg)
    out = None
    for dh in range(3):
        for dw in range(3):
            tap = xp[:, dh: dh + 2 * Ho: 2, dw: dw + 2 * Wo: 2, :]
            out = tap if out is None else jnp.maximum(out, tap)
    return out


@functools.partial(jax.jit, static_argnames=("num_classes",))
def gap_fc_sigmoid(x, fc_w, fc_b, *, num_classes):
    """AdaptiveAvgPool2d((1,1)) + Linear + sigmoid fused into one kernel.

    fc_w: (2048, ncp) bf16 pre-transposed & padded to 128 lanes; fc_b: (1, ncp).
    """
    N, H, W, C = x.shape
    ncp = fc_w.shape[1]
    xr = x.reshape(N, H * W, C).astype(jnp.bfloat16)
    out = pl.pallas_call(
        _gap_fc_sigmoid_kernel,
        out_shape=jax.ShapeDtypeStruct((N, ncp), jnp.float32),
        grid=(1,),
        in_specs=[
            pl.BlockSpec((N, H * W, C), lambda i: (0, 0, 0)),
            pl.BlockSpec((C, ncp), lambda i: (0, 0)),
            pl.BlockSpec((1, ncp), lambda i: (0, 0)),
        ],
        out_specs=pl.BlockSpec((N, ncp), lambda i: (0, 0)),
        compiler_params=pltpu.CompilerParams(
            dimension_semantics=("arbitrary",),
            vmem_limit_bytes=_VMEM_LIMIT,
        ),
    )(xr, fc_w, fc_b)
    return out[:, :num_classes]


# ----------------------------------------------------------------------------
# ResNet-152 parameters (synthetic, deterministic, pre-laid-out for the kernels)
# ----------------------------------------------------------------------------
RESNET152_LAYERS = [(64, 3, 1), (128, 8, 2), (256, 36, 2), (512, 3, 2)]
EXPANSION = 4


def _conv_bn_params(key, idx, cin, cout, k, layout="matmul"):
    fan_in = cin * k * k
    w = jax.random.normal(
        jax.random.fold_in(key, idx), (cout, cin, k, k), jnp.float32
    ) / np.sqrt(float(fan_in))
    # BatchNorm (eval mode, default stats) folded into per-channel scale/bias.
    eps = 1e-5
    gamma = jnp.ones((cout,), jnp.float32)
    beta = jnp.zeros((cout,), jnp.float32)
    running_mean = jnp.zeros((cout,), jnp.float32)
    running_var = jnp.ones((cout,), jnp.float32)
    scale = gamma / jnp.sqrt(running_var + eps)
    bias = beta - running_mean * scale
    if layout == "taps":          # fused 3x3 kernel: (kh*kw, Cin, Cout)
        w_l = jnp.transpose(w, (2, 3, 1, 0)).reshape(k * k, cin, cout)
    else:                         # matmul kernel: (Cin*kh*kw, Cout), cin-major
        w_l = jnp.transpose(w.reshape(cout, cin * k * k))
    return {"w": w_l.astype(jnp.bfloat16),
            "scale": scale.reshape(1, cout),
            "bias": bias.reshape(1, cout)}


def build_params(key, num_classes):
    counter = itertools.count()
    params = {"conv1": _conv_bn_params(key, next(counter), 3, 64, 7)}
    inplanes = 64
    layers = []
    for li, (planes, blocks, _) in enumerate(RESNET152_LAYERS):
        blk_list = []
        for b in range(blocks):
            cin = inplanes if b == 0 else planes * EXPANSION
            stride2 = (li > 0 and b == 0)
            blk = {
                "conv1": _conv_bn_params(key, next(counter), cin, planes, 1),
                "conv2": _conv_bn_params(key, next(counter), planes, planes, 3,
                                         layout="matmul" if stride2 else "taps"),
                "conv3": _conv_bn_params(key, next(counter), planes, planes * EXPANSION, 1),
            }
            if b == 0:  # stride != 1 or inplanes != planes * expansion
                blk["downsample"] = _conv_bn_params(
                    key, next(counter), inplanes, planes * EXPANSION, 1
                )
            blk_list.append(blk)
        layers.append(blk_list)
        inplanes = planes * EXPANSION
    params["layers"] = layers
    kfc = jax.random.fold_in(key, next(counter))
    fc_w = jax.random.normal(kfc, (num_classes, 2048), jnp.float32) / np.sqrt(2048.0)
    fc_b = jnp.zeros((num_classes,), jnp.float32)
    ncp = max(_round_up(num_classes, 128), 128)
    params["fc_w"] = (jnp.zeros((2048, ncp), jnp.float32)
                      .at[:, :num_classes].set(fc_w.T).astype(jnp.bfloat16))
    params["fc_b"] = jnp.zeros((1, ncp), jnp.float32).at[0, :num_classes].set(fc_b)
    return params


# ----------------------------------------------------------------------------
# Forward pass (== torch.sigmoid(resnet152_with_new_fc(x)))
# ----------------------------------------------------------------------------
def bottleneck(x, blk, stride):
    c1, c2, c3 = blk["conv1"], blk["conv2"], blk["conv3"]
    out = conv1x1_bn_act(x, c1["w"], c1["scale"], c1["bias"], stride=1, act="relu")
    if stride == 1:
        out = conv3x3_bn_act_fused(out, c2["w"], c2["scale"], c2["bias"], act="relu")
    else:
        out = conv_im2col_bn_act(out, c2["w"], c2["scale"], c2["bias"],
                                 kh=3, kw=3, stride=stride, padding=1, act="relu")
    if "downsample" in blk:
        d = blk["downsample"]
        identity = conv1x1_bn_act(x, d["w"], d["scale"], d["bias"],
                                  stride=stride, act="none")
    else:
        identity = x
    # conv3 + BN + residual add + ReLU fused into a single Pallas kernel.
    return conv1x1_bn_act(out, c3["w"], c3["scale"], c3["bias"],
                          residual=identity, stride=1, act="relu")


def resnet152_sigmoid_forward(params, x_nchw, num_classes):
    # PyTorch conv inputs are NCHW; transpose once to NHWC (bf16) for the kernels.
    x = jnp.transpose(x_nchw, (0, 2, 3, 1)).astype(jnp.bfloat16)
    p = params["conv1"]
    x = conv_im2col_bn_act(x, p["w"], p["scale"], p["bias"],
                           kh=7, kw=7, stride=2, padding=3, act="relu")
    x = maxpool_3x3_s2_p1(x)
    for li, layer in enumerate(params["layers"]):
        for bi, blk in enumerate(layer):
            stride = 2 if (li > 0 and bi == 0) else 1
            x = bottleneck(x, blk, stride)
    return gap_fc_sigmoid(x, params["fc_w"], params["fc_b"], num_classes=num_classes)


# ----------------------------------------------------------------------------
if __name__ == "__main__":
    num_classes = 10  # stands in for len(self.num_classes)
    key = jax.random.PRNGKey(0)
    params = build_params(key, num_classes)
    # Small but structurally consistent input: batch=2, 3 channels, 64x64.
    x = jax.random.normal(jax.random.fold_in(key, 999), (2, 3, 64, 64), jnp.float32)

    out = resnet152_sigmoid_forward(params, x, num_classes)
    out = jax.block_until_ready(out)

    assert out.shape == (2, num_classes), out.shape
    assert bool(jnp.all(jnp.isfinite(out)))
    assert bool(jnp.all((out >= 0.0) & (out <= 1.0)))
    print("KERNEL_OK")
</pallas_src>

<mosaic_0001>
module attributes {stable_mosaic.version = 11 : i64} {
  func.func @_mm_epilogue_kernel(%arg0: i32, %arg1: i32, %arg2: memref<1024x147xbf16, #tpu.memory_space<vmem>>, %arg3: memref<147x64xbf16, #tpu.memory_space<vmem>>, %arg4: memref<1x64xf32, #tpu.memory_space<vmem>>, %arg5: memref<1x64xf32, #tpu.memory_space<vmem>>, %arg6: memref<1024x64xbf16, #tpu.memory_space<vmem>>) attributes {dimension_semantics = [#tpu.dimension_semantics<parallel>, #tpu.dimension_semantics<parallel>], iteration_bounds = array<i64: 1, 2>, scalar_prefetch = 0 : i64, scratch_operands = 0 : i64, tpu.core_type = #tpu.core_type<tc>, window_params = [{transform_indices = @transform_0, window_bounds = array<i64: 1024, 147>}, {transform_indices = @transform_1, window_bounds = array<i64: 147, 64>}, {transform_indices = @transform_2, window_bounds = array<i64: 1, 64>}, {transform_indices = @transform_3, window_bounds = array<i64: 1, 64>}, {transform_indices = @transform_4, window_bounds = array<i64: 1024, 64>}]} {
    %c0 = arith.constant 0 : index
    %c0_0 = arith.constant 0 : index
    %0 = vector.load %arg2[%c0, %c0_0] : memref<1024x147xbf16, #tpu.memory_space<vmem>>, vector<1024x147xbf16>
    %c0_1 = arith.constant 0 : index
    %c0_2 = arith.constant 0 : index
    %1 = vector.load %arg3[%c0_1, %c0_2] : memref<147x64xbf16, #tpu.memory_space<vmem>>, vector<147x64xbf16>
    %cst = arith.constant dense<0.000000e+00> : vector<1024x64xf32>
    %2 = tpu.matmul %0, %1, %cst {dimension_numbers = #tpu.dot_dimension_numbers<[1], [0], [0], [1], [0, 0, 1, 1], [], []>} : vector<1024x147xbf16>, vector<147x64xbf16>, vector<1024x64xf32> -> vector<1024x64xf32>
    %c0_3 = arith.constant 0 : index
    %c0_4 = arith.constant 0 : index
    %3 = vector.load %arg4[%c0_3, %c0_4] : memref<1x64xf32, #tpu.memory_space<vmem>>, vector<1x64xf32>
    %4 = vector.broadcast %3 : vector<1x64xf32> to vector<1024x64xf32>
    %5 = arith.mulf %2, %4 : vector<1024x64xf32>
    %c0_5 = arith.constant 0 : index
    %c0_6 = arith.constant 0 : index
    %6 = vector.load %arg5[%c0_5, %c0_6] : memref<1x64xf32, #tpu.memory_space<vmem>>, vector<1x64xf32>
    %7 = vector.broadcast %6 : vector<1x64xf32> to vector<1024x64xf32>
    %8 = arith.addf %5, %7 : vector<1024x64xf32>
    %cst_7 = arith.constant 0.000000e+00 : f32
    %9 = vector.broadcast %cst_7 : f32 to vector<1024x64xf32>
    %10 = arith.maximumf %8, %9 : vector<1024x64xf32>
    %11 = arith.truncf %10 : vector<1024x64xf32> to vector<1024x64xbf16>
    %c0_8 = arith.constant 0 : index
    %c0_9 = arith.constant 0 : index
    %12 = vector.load %arg6[%c0_8, %c0_9] : memref<1024x64xbf16, #tpu.memory_space<vmem>>, vector<1024x64xbf16>
    tpu.vector_store %arg6[%c0_8, %c0_9], %11 {strides = array<i32>} : memref<1024x64xbf16, #tpu.memory_space<vmem>>, vector<1024x64xbf16>,
    return
  }
  func.func @transform_0(%arg0: i32, %arg1: i32) -> (i32, i32) {
    %c0_i32 = arith.constant 0 : i32
    %c0_i32_0 = arith.constant 0 : i32
    return %arg1, %c0_i32 : i32, i32
  }
  func.func @transform_1(%arg0: i32, %arg1: i32) -> (i32, i32) {
    %c0_i32 = arith.constant 0 : i32
    %c0_i32_0 = arith.constant 0 : i32
    return %c0_i32, %arg0 : i32, i32
  }
  func.func @transform_2(%arg0: i32, %arg1: i32) -> (i32, i32) {
    %c0_i32 = arith.constant 0 : i32
    %c0_i32_0 = arith.constant 0 : i32
    return %c0_i32, %arg0 : i32, i32
  }
  func.func @transform_3(%arg0: i32, %arg1: i32) -> (i32, i32) {
    %c0_i32 = arith.constant 0 : i32
    %c0_i32_0 = arith.constant 0 : i32
    return %c0_i32, %arg0 : i32, i32
  }
  func.func @transform_4(%arg0: i32, %arg1: i32) -> (i32, i32) {
    %c0_i32 = arith.constant 0 : i32
    return %arg1, %arg0 : i32, i32
  }
}

</mosaic_0001>

<llo_original>
// kernel: conv_im2col_bn_act.1
$region0: #{conv_im2col_bn_act.1}
  #allocation0 [shape = 'u32[]', space=smem, size = 0x4, offset = 0x4, fixed_abs, tag = 'smem constant byte address 0x4 - core index']
  #allocation1 [shape = 'u32[144,128]{1,0:T(1,128)}', space=vmem, size = 0x12000, scoped, tag = 'internal scratch']
  %s0 = inlined_call_operand.vmem [shape: bf16[2048,147], index: 0, kind: input, shape index: {}]
  %s1 = inlined_call_operand.vmem [shape: bf16[147,64], index: 1, kind: input, shape index: {}]
  %s2 = inlined_call_operand.vmem [shape: f32[1,64], index: 2, kind: input, shape index: {}]
  %s3 = inlined_call_operand.vmem [shape: f32[1,64], index: 3, kind: input, shape index: {}]
  %s4 = inlined_call_operand.hbm [shape: bf16[2048,64], index: 4, kind: output, shape index: {}]
  %s5 = sld [smem:[#allocation0]]
  $region49: #{conv_im2col_bn_act.1} parent=0
    _
  %s7 = ssub.s32 1, %s5
  %s8 = scalar_select 0, %s7, %s5
  $region1: #{conv_im2col_bn_act.1} parent=0
    #allocation2 [shape = 'u8[524288]{0}', space=vmem, size = 0x80000, scoped, tag = 'output window, operand 0']
    #allocation3 [shape = 's32[2]{0}', space=sflag, size = 0x8, scoped, tag = 'scoped memory for conv_im2col_bn_act.1']
    %9 = vsyncpa [#allocation3], 0
    %s10 = scalar_lea.sflag [#allocation3], 1
    %11 = vsyncpa %s10, 0
    loop: start=0, step=1, limit=4
    $region2: #{conv_im2col_bn_act.1} parent=1 // loop_pre_header
      _
    $region3: #{conv_im2col_bn_act.1} parent=1 // loop_header
      %s13 = sphi 0, %s17
      %p14 = scmp.ge.s32.totalorder %s13, 4
      %s20 = sphi 0, %s32
      %s21 = sphi 0, %s28
      %s22 = sphi 0, %s20
      %s23 = sphi 0, %s21
      %s24 = sphi 0, %s22
      %s25 = sphi 0, %s23
      %s35 = sphi 0, %s37
      %s38 = sphi 0, %s35
      %s39 = sphi 0, %s38
      %s55 = sphi 0, %s39
      %s61 = sphi 0, %s63
      %s64 = sphi 0, %s61
      %s65 = sphi 0, %s64
      %s81 = sphi 0, %s65
      %s87 = sphi 0, %s89
      %s90 = sphi 0, %s87
      %s91 = sphi 0, %s90
      %s107 = sphi 0, %s91
      %s113 = sphi 0, %s115
      %s116 = sphi 0, %s113
      %s117 = sphi 0, %s116
      %s133 = sphi 0, %s117
      %s141 = sphi 0, %s143
      %s144 = sphi 0, %s141
      %s145 = sphi 0, %s144
      %s161 = sphi 0, %s145
    $region4: #{conv_im2col_bn_act.1} parent=1 // loop_header_branch
      %16 = sbr.rel (%p14) target = $region8
    $region5: #{conv_im2col_bn_act.1} parent=1 // loop_body
      %s18 = ssub.s32 %s13, 1
      %s19 = ssub.s32 %s13, 2
      %s26 = sadd.s32 1, %s21
      %p27 = scmp.ge.s32.totalorder %s26, 2
      %s28 = scalar_select %p27, 0, %s26
      %s29 = sadd.s32 1, %s20
      %s30 = scalar_select %p27, %s29, %s20
      %p31 = scmp.ge.s32.totalorder %s30, 1
      %s32 = scalar_select %p31, 0, %s30
      %s33 = ssub.s32 %s21, %s28
      %p34 = scmp.eq.s32.totalorder %s33, 0
      %s36 = sadd.s32 %s35, 1
      %s37 = scalar_select %p34, %s35, %s36
      %p40 = pneg %p34
      %p41 = scmp.eq.s32.totalorder %s13, 1
      %p42 = por %p40, %p41
      %p43 = scmp.ne.s32.totalorder %s35, %s38
      %p44 = scmp.eq.s32.totalorder %s13, 0
      %p45 = por %p43, %p44
      %p46 = scmp.ne.s32.totalorder %s35, %s38
      %p47 = scmp.eq.s32.totalorder %s18, 1
      %p48 = por %p46, %p47
      %p49 = scmp.ne.s32.totalorder %s38, %s39
      %p50 = scmp.eq.s32.totalorder %s18, 0
      %p51 = por %p49, %p50
      %p52 = scmp.ne.s32.totalorder %s38, %s39
      %p53 = scmp.eq.s32.totalorder %s19, 1
      %p54 = por %p52, %p53
      %p56 = scmp.ne.s32.totalorder %s39, %s55
      %p57 = scmp.eq.s32.totalorder %s19, 0
      %p58 = por %p56, %p57
      %s59 = ssub.s32 %s20, %s32
      %p60 = scmp.eq.s32.totalorder %s59, 0
      %s62 = sadd.s32 %s61, 1
      %s63 = scalar_select %p60, %s61, %s62
      %p66 = pneg %p60
      %p67 = scmp.eq.s32.totalorder %s13, 1
      %p68 = por %p66, %p67
      %p69 = scmp.ne.s32.totalorder %s61, %s64
      %p70 = scmp.eq.s32.totalorder %s13, 0
      %p71 = por %p69, %p70
      %p72 = scmp.ne.s32.totalorder %s61, %s64
      %p73 = scmp.eq.s32.totalorder %s18, 1
      %p74 = por %p72, %p73
      %p75 = scmp.ne.s32.totalorder %s64, %s65
      %p76 = scmp.eq.s32.totalorder %s18, 0
      %p77 = por %p75, %p76
      %p78 = scmp.ne.s32.totalorder %s64, %s65
      %p79 = scmp.eq.s32.totalorder %s19, 1
      %p80 = por %p78, %p79
      %p82 = scmp.ne.s32.totalorder %s65, %s81
      %p83 = scmp.eq.s32.totalorder %s19, 0
      %p84 = por %p82, %p83
      %s85 = ssub.s32 %s20, %s32
      %p86 = scmp.eq.s32.totalorder %s85, 0
      %s88 = sadd.s32 %s87, 1
      %s89 = scalar_select %p86, %s87, %s88
      %p92 = pneg %p86
      %p93 = scmp.eq.s32.totalorder %s13, 1
      %p94 = por %p92, %p93
      %p95 = scmp.ne.s32.totalorder %s87, %s90
      %p96 = scmp.eq.s32.totalorder %s13, 0
      %p97 = por %p95, %p96
      %p98 = scmp.ne.s32.totalorder %s87, %s90
      %p99 = scmp.eq.s32.totalorder %s18, 1
      %p100 = por %p98, %p99
      %p101 = scmp.ne.s32.totalorder %s90, %s91
      %p102 = scmp.eq.s32.totalorder %s18, 0
      %p103 = por %p101, %p102
      %p104 = scmp.ne.s32.totalorder %s90, %s91
      %p105 = scmp.eq.s32.totalorder %s19, 1
      %p106 = por %p104, %p105
      %p108 = scmp.ne.s32.totalorder %s91, %s107
      %p109 = scmp.eq.s32.totalorder %s19, 0
      %p110 = por %p108, %p109
      %s111 = ssub.s32 %s20, %s32
      %p112 = scmp.eq.s32.totalorder %s111, 0
      %s114 = sadd.s32 %s113, 1
      %s115 = scalar_select %p112, %s113, %s114
      %p118 = pneg %p112
      %p119 = scmp.eq.s32.totalorder %s13, 1
      %p120 = por %p118, %p119
      %p121 = scmp.ne.s32.totalorder %s113, %s116
      %p122 = scmp.eq.s32.totalorder %s13, 0
      %p123 = por %p121, %p122
      %p124 = scmp.ne.s32.totalorder %s113, %s116
      %p125 = scmp.eq.s32.totalorder %s18, 1
      %p126 = por %p124, %p125
      %p127 = scmp.ne.s32.totalorder %s116, %s117
      %p128 = scmp.eq.s32.totalorder %s18, 0
      %p129 = por %p127, %p128
      %p130 = scmp.ne.s32.totalorder %s116, %s117
      %p131 = scmp.eq.s32.totalorder %s19, 1
      %p132 = por %p130, %p131
      %p134 = scmp.ne.s32.totalorder %s117, %s133
      %p135 = scmp.eq.s32.totalorder %s19, 0
      %p136 = por %p134, %p135
      %s137 = ssub.s32 %s21, %s28
      %s138 = ssub.s32 %s20, %s32
      %s139 = sor.u32 %s137, %s138
      %p140 = scmp.eq.s32.totalorder %s139, 0
      %s142 = sadd.s32 %s141, 1
      %s143 = scalar_select %p140, %s141, %s142
      %p146 = pneg %p140
      %p147 = scmp.eq.s32.totalorder %s13, 1
      %p148 = por %p146, %p147
      %p149 = scmp.ne.s32.totalorder %s141, %s144
      %p150 = scmp.eq.s32.totalorder %s13, 0
      %p151 = por %p149, %p150
      %p152 = scmp.ne.s32.totalorder %s141, %s144
      %p153 = scmp.eq.s32.totalorder %s18, 1
      %p154 = por %p152, %p153
      %p155 = scmp.ne.s32.totalorder %s144, %s145
      %p156 = scmp.eq.s32.totalorder %s18, 0
      %p157 = por %p155, %p156
      %p158 = scmp.ne.s32.totalorder %s144, %s145
      %p159 = scmp.eq.s32.totalorder %s19, 1
      %p160 = por %p158, %p159
      %p162 = scmp.ne.s32.totalorder %s145, %s161
      %p163 = scmp.eq.s32.totalorder %s19, 0
      %p164 = por %p162, %p163
      %p165 = scmp.le.s32.totalorder 1, %s13
      %p166 = scmp.lt.s32.totalorder %s13, 3
      %p167 = pnand %p165, %p166
      %p168 = pneg %p167
      // Predicated region
      $region9: #{conv_im2col_bn_act.1} parent=5 // pred_check
        _
      $region10: #{conv_im2col_bn_act.1} parent=5 // pred_check_branch
        %170 = sbr.rel (%p167) target = $region12
      $region11: #{conv_im2col_bn_act.1} parent=5 // pred_region
        %s171 = ssub.s32 %s13, 1
        // Predicated region
        $region13: #{conv_im2col_bn_act.1} parent=11 // pred_check
          %p172 = pneg %p77
        $region14: #{conv_im2col_bn_act.1} parent=11 // pred_check_branch
          %174 = sbr.rel (%p172) target = $region16
        $region15: #{conv_im2col_bn_act.1} parent=11 // pred_region
          %p175 = scmp.lt.s32.totalorder %s22, 0
          %s176 = scalar_select %p175, %s22, 0
          %s177 = smul.addr %s176, 4
          %s178 = scalar_lea.vmem %s1, %s177
        $region16: #{conv_im2col_bn_act.1} parent=11 // pred_fallthru
          _
        // Predicated region
        $region17: #{conv_im2col_bn_act.1} parent=11 // pred_check
          %p179 = pneg %p103
        $region18: #{conv_im2col_bn_act.1} parent=11 // pred_check_branch
          %181 = sbr.rel (%p179) target = $region20
        $region19: #{conv_im2col_bn_act.1} parent=11 // pred_region
          %p182 = scmp.lt.s32.totalorder %s22, 0
          %s183 = scalar_select %p182, %s22, 0
          %s184 = scalar_lea.vmem %s2, %s183
        $region20: #{conv_im2col_bn_act.1} parent=11 // pred_fallthru
          _
        // Predicated region
        $region21: #{conv_im2col_bn_act.1} parent=11 // pred_check
          %p185 = pneg %p129
        $region22: #{conv_im2col_bn_act.1} parent=11 // pred_check_branch
          %187 = sbr.rel (%p185) target = $region24
        $region23: #{conv_im2col_bn_act.1} parent=11 // pred_region
          %p188 = scmp.lt.s32.totalorder %s22, 0
          %s189 = scalar_select %p188, %s22, 0
          %s190 = scalar_lea.vmem %s3, %s189
        $region24: #{conv_im2col_bn_act.1} parent=11 // pred_fallthru
          _
      $region12: #{conv_im2col_bn_act.1} parent=5 // pred_fallthru
        _
      %p191 = scmp.lt.s32.totalorder %s13, 2
      // Predicated region
      $region25: #{conv_im2col_bn_act.1} parent=5 // pred_check
        %p192 = pneg %p191
      $region26: #{conv_im2col_bn_act.1} parent=5 // pred_check_branch
        %194 = sbr.rel (%p192) target = $region28
      $region27: #{conv_im2col_bn_act.1} parent=5 // pred_region
        // Predicated region
        $region29: #{conv_im2col_bn_act.1} parent=27 // pred_check
          %p195 = pneg %p45
        $region30: #{conv_im2col_bn_act.1} parent=27 // pred_check_branch
          %197 = sbr.rel (%p195) target = $region32
        $region31: #{conv_im2col_bn_act.1} parent=27 // pred_region
          %s198 = smul.u32 128, %s21
          %p199 = scmp.lt.s32.totalorder %s198, 255
          %s200 = scalar_select %p199, %s198, 255
          %s201 = smul.addr %s200, 2
          %s202 = smul.addr %s201, 4
          %s203 = scalar_lea.vmem %s0, %s202
          %s204 = smul.u32 128, %s21
        $region32: #{conv_im2col_bn_act.1} parent=27 // pred_fallthru
          _
      $region28: #{conv_im2col_bn_act.1} parent=5 // pred_fallthru
        _
      %p205 = scmp.le.s32.totalorder 1, %s13
      %p206 = scmp.lt.s32.totalorder %s13, 3
      %p207 = pnand %p205, %p206
      %p208 = pneg %p207
      // Predicated region
      $region33: #{conv_im2col_bn_act.1} parent=5 // pred_check
        _
      $region34: #{conv_im2col_bn_act.1} parent=5 // pred_check_branch
        %210 = sbr.rel (%p207) target = $region36
      $region35: #{conv_im2col_bn_act.1} parent=5 // pred_region
        %s211 = ssub.s32 %s13, 1
        %s212 = smul.u32 128, %s23
        %p213 = scmp.lt.s32.totalorder %s212, 255
        %s214 = scalar_select %p213, %s212, 255
        %s215 = smul.addr %s214, 2
        %s216 = smul.addr %s215, 4
        %s217 = scalar_lea.vmem %s0, %s216
        %p218 = pneg %p51
        %p219 = pneg %p48
        %p220 = scmp.lt.s32.totalorder %s22, 0
        %s221 = scalar_select %p220, %s22, 0
        %s222 = smul.addr %s221, 4
        %s223 = scalar_lea.vmem %s1, %s222
        %p224 = pneg %p77
        %p225 = pneg %p74
        %p226 = scmp.lt.s32.totalorder %s22, 0
        %s227 = scalar_select %p226, %s22, 0
        %s228 = scalar_lea.vmem %s2, %s227
        %p229 = pneg %p103
        %p230 = pneg %p100
        %p231 = scmp.lt.s32.totalorder %s22, 0
        %s232 = scalar_select %p231, %s22, 0
        %s233 = scalar_lea.vmem %s3, %s232
        %p234 = pneg %p129
        %p235 = pneg %p126
        %p236 = pneg %p157
        %p237 = pneg %p154
        %s238 = sand.u32 %s144, 1
        %s239 = scalar_lea.sflag [#allocation3], %s238
        %s240 = sand.u32 %s144, 1
        %s241 = smul.addr %s240, 512
        %s242 = scalar_lea.vmem [#allocation2], %s241
        %s243 = smul.u32 128, %s23
        %p244 = scmp.lt.s32.totalorder %s243, 255
        %s245 = scalar_select %p244, %s243, 255
        %s246 = smul.addr %s245, 2
        %s247 = smul.addr %s246, 4
        %s248 = scalar_lea.vmem %s0, %s247
        %s249 = smul.u32 128, %s23
        %p250 = scmp.lt.s32.totalorder %s22, 0
        %s251 = scalar_select %p250, %s22, 0
        %s252 = smul.addr %s251, 4
        %s253 = scalar_lea.vmem %s1, %s252
        %p254 = scmp.lt.s32.totalorder %s22, 0
        %s255 = scalar_select %p254, %s22, 0
        %s256 = scalar_lea.vmem %s2, %s255
        %p257 = scmp.lt.s32.totalorder %s22, 0
        %s258 = scalar_select %p257, %s22, 0
        %s259 = scalar_lea.vmem %s3, %s258
        %s260 = smul.u32 128, %s23
        %v262 = vld [vmem:[%s248] sm:$0xff]
        %v263 = vld [vmem:[%s248 + $0x8] sm:$0xff]
        %v264 = vld [vmem:[%s248 + $0x10] sm:$0xff]
        %v265 = vld [vmem:[%s248 + $0x18] sm:$0xff]
        %v266 = vld [vmem:[%s248 + $0x20] sm:$0xff]
        %v267 = vld [vmem:[%s248 + $0x28] sm:$0xff]
        %v268 = vld [vmem:[%s248 + $0x30] sm:$0xff]
        %v269 = vld [vmem:[%s248 + $0x38] sm:$0xff]
        %v270 = vld [vmem:[%s248 + $0x40] sm:$0xff]
        %v271 = vld [vmem:[%s248 + $0x48] sm:$0xff]
        %v272 = vld [vmem:[%s248 + $0x50] sm:$0xff]
        %v273 = vld [vmem:[%s248 + $0x58] sm:$0xff]
        %v274 = vld [vmem:[%s248 + $0x60] sm:$0xff]
        %v275 = vld [vmem:[%s248 + $0x68] sm:$0xff]
        %v276 = vld [vmem:[%s248 + $0x70] sm:$0xff]
        %v277 = vld [vmem:[%s248 + $0x78] sm:$0xff]
        %v278 = vld [vmem:[%s248 + $0x80] sm:$0xff]
        %v279 = vld [vmem:[%s248 + $0x88] sm:$0xff]
        %v280 = vld [vmem:[%s248 + $0x90] sm:$0xff]
        %v281 = vld [vmem:[%s248 + $0x98] sm:$0xff]
        %v282 = vld [vmem:[%s248 + $0xa0] sm:$0xff]
        %v283 = vld [vmem:[%s248 + $0xa8] sm:$0xff]
        %v284 = vld [vmem:[%s248 + $0xb0] sm:$0xff]
        %v285 = vld [vmem:[%s248 + $0xb8] sm:$0xff]
        %v286 = vld [vmem:[%s248 + $0xc0] sm:$0xff]
        %v287 = vld [vmem:[%s248 + $0xc8] sm:$0xff]
        %v288 = vld [vmem:[%s248 + $0xd0] sm:$0xff]
        %v289 = vld [vmem:[%s248 + $0xd8] sm:$0xff]
        %v290 = vld [vmem:[%s248 + $0xe0] sm:$0xff]
        %v291 = vld [vmem:[%s248 + $0xe8] sm:$0xff]
        %v292 = vld [vmem:[%s248 + $0xf0] sm:$0xff]
        %v293 = vld [vmem:[%s248 + $0xf8] sm:$0xff]
        %v294 = vld [vmem:[%s248 + $0x100] sm:$0xff]
        %v295 = vld [vmem:[%s248 + $0x108] sm:$0xff]
        %v296 = vld [vmem:[%s248 + $0x110] sm:$0xff]
        %v297 = vld [vmem:[%s248 + $0x118] sm:$0xff]
        %v298 = vld [vmem:[%s248 + $0x120] sm:$0xff]
        %v299 = vld [vmem:[%s248 + $0x128] sm:$0xff]
        %v300 = vld [vmem:[%s248 + $0x130] sm:$0xff]
        %v301 = vld [vmem:[%s248 + $0x138] sm:$0xff]
        %v302 = vld [vmem:[%s248 + $0x140] sm:$0xff]
        %v303 = vld [vmem:[%s248 + $0x148] sm:$0xff]
        %v304 = vld [vmem:[%s248 + $0x150] sm:$0xff]
        %v305 = vld [vmem:[%s248 + $0x158] sm:$0xff]
        %v306 = vld [vmem:[%s248 + $0x160] sm:$0xff]
        %v307 = vld [vmem:[%s248 + $0x168] sm:$0xff]
        %v308 = vld [vmem:[%s248 + $0x170] sm:$0xff]
        %v309 = vld [vmem:[%s248 + $0x178] sm:$0xff]
        %v310 = vld [vmem:[%s248 + $0x180] sm:$0xff]
        %v311 = vld [vmem:[%s248 + $0x188] sm:$0xff]
        %v312 = vld [vmem:[%s248 + $0x190] sm:$0xff]
        %v313 = vld [vmem:[%s248 + $0x198] sm:$0xff]
        %v314 = vld [vmem:[%s248 + $0x1a0] sm:$0xff]
        %v315 = vld [vmem:[%s248 + $0x1a8] sm:$0xff]
        %v316 = vld [vmem:[%s248 + $0x1b0] sm:$0xff]
        %v317 = vld [vmem:[%s248 + $0x1b8] sm:$0xff]
        %v318 = vld [vmem:[%s248 + $0x1c0] sm:$0xff]
        %v319 = vld [vmem:[%s248 + $0x1c8] sm:$0xff]
        %v320 = vld [vmem:[%s248 + $0x1d0] sm:$0xff]
        %v321 = vld [vmem:[%s248 + $0x1d8] sm:$0xff]
        %v322 = vld [vmem:[%s248 + $0x1e0] sm:$0xff]
        %v323 = vld [vmem:[%s248 + $0x1e8] sm:$0xff]
        %v324 = vld [vmem:[%s248 + $0x1f0] sm:$0xff]
        %v325 = vld [vmem:[%s248 + $0x1f8] sm:$0xff]
        %v326 = vld [vmem:[%s248 + $0x200] sm:$0xff]
        %v327 = vld [vmem:[%s248 + $0x208] sm:$0xff]
        %v328 = vld [vmem:[%s248 + $0x210] sm:$0xff]
        %v329 = vld [vmem:[%s248 + $0x218] sm:$0xff]
        %v330 = vld [vmem:[%s248 + $0x220] sm:$0xff]
        %v331 = vld [vmem:[%s248 + $0x228] sm:$0xff]
        %v332 = vld [vmem:[%s248 + $0x230] sm:$0xff]
        %v333 = vld [vmem:[%s248 + $0x238] sm:$0xff]
        %v334 = vld [vmem:[%s248 + $0x240] sm:$0xff]
        %v335 = vld [vmem:[%s248 + $0x248] sm:$0xff]
        %v336 = vld [vmem:[%s248 + $0x250] sm:$0xff]
        %v337 = vld [vmem:[%s248 + $0x258] sm:$0xff]
        %v338 = vld [vmem:[%s248 + $0x260] sm:$0xff]
        %v339 = vld [vmem:[%s248 + $0x268] sm:$0xff]
        %v340 = vld [vmem:[%s248 + $0x270] sm:$0xff]
        %v341 = vld [vmem:[%s248 + $0x278] sm:$0xff]
        %v342 = vld [vmem:[%s248 + $0x280] sm:$0xff]
        %v343 = vld [vmem:[%s248 + $0x288] sm:$0xff]
        %v344 = vld [vmem:[%s248 + $0x290] sm:$0xff]
        %v345 = vld [vmem:[%s248 + $0x298] sm:$0xff]
        %v346 = vld [vmem:[%s248 + $0x2a0] sm:$0xff]
        %v347 = vld [vmem:[%s248 + $0x2a8] sm:$0xff]
        %v348 = vld [vmem:[%s248 + $0x2b0] sm:$0xff]
        %v349 = vld [vmem:[%s248 + $0x2b8] sm:$0xff]
        %v350 = vld [vmem:[%s248 + $0x2c0] sm:$0xff]
        %v351 = vld [vmem:[%s248 + $0x2c8] sm:$0xff]
        %v352 = vld [vmem:[%s248 + $0x2d0] sm:$0xff]
        %v353 = vld [vmem:[%s248 + $0x2d8] sm:$0xff]
        %v354 = vld [vmem:[%s248 + $0x2e0] sm:$0xff]
        %v355 = vld [vmem:[%s248 + $0x2e8] sm:$0xff]
        %v356 = vld [vmem:[%s248 + $0x2f0] sm:$0xff]
        %v357 = vld [vmem:[%s248 + $0x2f8] sm:$0xff]
        %v358 = vld [vmem:[%s248 + $0x300] sm:$0xff]
        %v359 = vld [vmem:[%s248 + $0x308] sm:$0xff]
        %v360 = vld [vmem:[%s248 + $0x310] sm:$0xff]
        %v361 = vld [vmem:[%s248 + $0x318] sm:$0xff]
        %v362 = vld [vmem:[%s248 + $0x320] sm:$0xff]
        %v363 = vld [vmem:[%s248 + $0x328] sm:$0xff]
        %v364 = vld [vmem:[%s248 + $0x330] sm:$0xff]
        %v365 = vld [vmem:[%s248 + $0x338] sm:$0xff]
        %v366 = vld [vmem:[%s248 + $0x340] sm:$0xff]
        %v367 = vld [vmem:[%s248 + $0x348] sm:$0xff]
        %v368 = vld [vmem:[%s248 + $0x350] sm:$0xff]
        %v369 = vld [vmem:[%s248 + $0x358] sm:$0xff]
        %v370 = vld [vmem:[%s248 + $0x360] sm:$0xff]
        %v371 = vld [vmem:[%s248 + $0x368] sm:$0xff]
        %v372 = vld [vmem:[%s248 + $0x370] sm:$0xff]
        %v373 = vld [vmem:[%s248 + $0x378] sm:$0xff]
        %v374 = vld [vmem:[%s248 + $0x380] sm:$0xff]
        %v375 = vld [vmem:[%s248 + $0x388] sm:$0xff]
        %v376 = vld [vmem:[%s248 + $0x390] sm:$0xff]
        %v377 = vld [vmem:[%s248 + $0x398] sm:$0xff]
        %v378 = vld [vmem:[%s248 + $0x3a0] sm:$0xff]
        %v379 = vld [vmem:[%s248 + $0x3a8] sm:$0xff]
        %v380 = vld [vmem:[%s248 + $0x3b0] sm:$0xff]
        %v381 = vld [vmem:[%s248 + $0x3b8] sm:$0xff]
        %v382 = vld [vmem:[%s248 + $0x3c0] sm:$0xff]
        %v383 = vld [vmem:[%s248 + $0x3c8] sm:$0xff]
        %v384 = vld [vmem:[%s248 + $0x3d0] sm:$0xff]
        %v385 = vld [vmem:[%s248 + $0x3d8] sm:$0xff]
        %v386 = vld [vmem:[%s248 + $0x3e0] sm:$0xff]
        %v387 = vld [vmem:[%s248 + $0x3e8] sm:$0xff]
        %v388 = vld [vmem:[%s248 + $0x3f0] sm:$0xff]
        %v389 = vld [vmem:[%s248 + $0x3f8] sm:$0xff]
        %v390 = vld [vmem:[%s253] sm:$0xf]
        %v391 = vld [vmem:[%s253 + $0x4] sm:$0xf]
        %v392 = vld [vmem:[%s253 + $0x8] sm:$0xf]
        %v393 = vld [vmem:[%s253 + $0xc] sm:$0xf]
        %v394 = vld [vmem:[%s253 + $0x10] sm:$0xf]
        %v395 = vld [vmem:[%s253 + $0x14] sm:$0xf]
        %v396 = vld [vmem:[%s253 + $0x18] sm:$0xf]
        %v397 = vld [vmem:[%s253 + $0x1c] sm:$0xf]
        %v398 = vld [vmem:[%s253 + $0x20] sm:$0xf]
        %v399 = vld [vmem:[%s253 + $0x24] sm:$0xf]
        %v400 = vld [vmem:[%s253 + $0x28] sm:$0xf]
        %v401 = vld [vmem:[%s253 + $0x2c] sm:$0xf]
        %v402 = vld [vmem:[%s253 + $0x30] sm:$0xf]
        %v403 = vld [vmem:[%s253 + $0x34] sm:$0xf]
        %v404 = vld [vmem:[%s253 + $0x38] sm:$0xf]
        %v405 = vld [vmem:[%s253 + $0x3c] sm:$0xf]
        %v406 = vld [vmem:[%s253 + $0x40] sm:$0xf]
        %v407 = vld [vmem:[%s253 + $0x44] sm:$0xf]
        %v408 = vld [vmem:[%s253 + $0x48] sm:$0x3]
        %v537 = vunpack.c.l.b16 %v262
        %v538 = vunpack.c.h.b16 %v262
        %v539 = vunpack.c.l.b16 %v263
        %v540 = vunpack.c.h.b16 %v263
        %v541 = vunpack.c.l.b16 %v264
        %v542 = vunpack.c.h.b16 %v264
        %v543 = vunpack.c.l.b16 %v265
        %v544 = vunpack.c.h.b16 %v265
        %v545 = vunpack.c.l.b16 %v266
        %v546 = vunpack.c.h.b16 %v266
        %v547 = vunpack.c.l.b16 %v267
        %v548 = vunpack.c.h.b16 %v267
        %v549 = vunpack.c.l.b16 %v268
        %v550 = vunpack.c.h.b16 %v268
        %v551 = vunpack.c.l.b16 %v269
        %v552 = vunpack.c.h.b16 %v269
        %v553 = vunpack.c.l.b16 %v270
        %v554 = vunpack.c.h.b16 %v270
        %v555 = vunpack.c.l.b16 %v271
        %v556 = vunpack.c.h.b16 %v271
        %v557 = vunpack.c.l.b16 %v272
        %v558 = vunpack.c.h.b16 %v272
        %v559 = vunpack.c.l.b16 %v273
        %v560 = vunpack.c.h.b16 %v273
        %v561 = vunpack.c.l.b16 %v274
        %v562 = vunpack.c.h.b16 %v274
        %v563 = vunpack.c.l.b16 %v275
        %v564 = vunpack.c.h.b16 %v275
        %v565 = vunpack.c.l.b16 %v276
        %v566 = vunpack.c.h.b16 %v276
        %v567 = vunpack.c.l.b16 %v277
        %v568 = vunpack.c.h.b16 %v277
        %v569 = vunpack.c.l.b16 %v278
        %v570 = vunpack.c.h.b16 %v278
        %v571 = vunpack.c.l.b16 %v279
        %v572 = vunpack.c.h.b16 %v279
        %v573 = vunpack.c.l.b16 %v280
        %v574 = vunpack.c.h.b16 %v280
        %v575 = vunpack.c.l.b16 %v281
        %v576 = vunpack.c.h.b16 %v281
        %v577 = vunpack.c.l.b16 %v282
        %v578 = vunpack.c.h.b16 %v282
        %v579 = vunpack.c.l.b16 %v283
        %v580 = vunpack.c.h.b16 %v283
        %v581 = vunpack.c.l.b16 %v284
        %v582 = vunpack.c.h.b16 %v284
        %v583 = vunpack.c.l.b16 %v285
        %v584 = vunpack.c.h.b16 %v285
        %v585 = vunpack.c.l.b16 %v286
        %v586 = vunpack.c.h.b16 %v286
        %v587 = vunpack.c.l.b16 %v287
        %v588 = vunpack.c.h.b16 %v287
        %v589 = vunpack.c.l.b16 %v288
        %v590 = vunpack.c.h.b16 %v288
        %v591 = vunpack.c.l.b16 %v289
        %v592 = vunpack.c.h.b16 %v289
        %v593 = vunpack.c.l.b16 %v290
        %v594 = vunpack.c.h.b16 %v290
        %v595 = vunpack.c.l.b16 %v291
        %v596 = vunpack.c.h.b16 %v291
        %v597 = vunpack.c.l.b16 %v292
        %v598 = vunpack.c.h.b16 %v292
        %v599 = vunpack.c.l.b16 %v293
        %v600 = vunpack.c.h.b16 %v293
        %v601 = vunpack.c.l.b16 %v294
        %v602 = vunpack.c.h.b16 %v294
        %v603 = vunpack.c.l.b16 %v295
        %v604 = vunpack.c.h.b16 %v295
        %v605 = vunpack.c.l.b16 %v296
        %v606 = vunpack.c.h.b16 %v296
        %v607 = vunpack.c.l.b16 %v297
        %v608 = vunpack.c.h.b16 %v297
        %v609 = vunpack.c.l.b16 %v298
        %v610 = vunpack.c.h.b16 %v298
        %v611 = vunpack.c.l.b16 %v299
        %v612 = vunpack.c.h.b16 %v299
        %v613 = vunpack.c.l.b16 %v300
        %v614 = vunpack.c.h.b16 %v300
        %v615 = vunpack.c.l.b16 %v301
        %v616 = vunpack.c.h.b16 %v301
        %v617 = vunpack.c.l.b16 %v302
        %v618 = vunpack.c.h.b16 %v302
        %v619 = vunpack.c.l.b16 %v303
        %v620 = vunpack.c.h.b16 %v303
        %v621 = vunpack.c.l.b16 %v304
        %v622 = vunpack.c.h.b16 %v304
        %v623 = vunpack.c.l.b16 %v305
        %v624 = vunpack.c.h.b16 %v305
        %v625 = vunpack.c.l.b16 %v306
        %v626 = vunpack.c.h.b16 %v306
        %v627 = vunpack.c.l.b16 %v307
        %v628 = vunpack.c.h.b16 %v307
        %v629 = vunpack.c.l.b16 %v308
        %v630 = vunpack.c.h.b16 %v308
        %v631 = vunpack.c.l.b16 %v309
        %v632 = vunpack.c.h.b16 %v309
        %v633 = vunpack.c.l.b16 %v310
        %v634 = vunpack.c.h.b16 %v310
        %v635 = vunpack.c.l.b16 %v311
        %v636 = vunpack.c.h.b16 %v311
        %v637 = vunpack.c.l.b16 %v312
        %v638 = vunpack.c.h.b16 %v312
        %v639 = vunpack.c.l.b16 %v313
        %v640 = vunpack.c.h.b16 %v313
        %v641 = vunpack.c.l.b16 %v314
        %v642 = vunpack.c.h.b16 %v314
        %v643 = vunpack.c.l.b16 %v315
        %v644 = vunpack.c.h.b16 %v315
        %v645 = vunpack.c.l.b16 %v316
        %v646 = vunpack.c.h.b16 %v316
        %v647 = vunpack.c.l.b16 %v317
        %v648 = vunpack.c.h.b16 %v317
        %v649 = vunpack.c.l.b16 %v318
        %v650 = vunpack.c.h.b16 %v318
        %v651 = vunpack.c.l.b16 %v319
        %v652 = vunpack.c.h.b16 %v319
        %v653 = vunpack.c.l.b16 %v320
        %v654 = vunpack.c.h.b16 %v320
        %v655 = vunpack.c.l.b16 %v321
        %v656 = vunpack.c.h.b16 %v321
        %v657 = vunpack.c.l.b16 %v322
        %v658 = vunpack.c.h.b16 %v322
        %v659 = vunpack.c.l.b16 %v323
        %v660 = vunpack.c.h.b16 %v323
        %v661 = vunpack.c.l.b16 %v324
        %v662 = vunpack.c.h.b16 %v324
        %v663 = vunpack.c.l.b16 %v325
        %v664 = vunpack.c.h.b16 %v325
        %v665 = vunpack.c.l.b16 %v326
        %v666 = vunpack.c.h.b16 %v326
        %v667 = vunpack.c.l.b16 %v327
        %v668 = vunpack.c.h.b16 %v327
        %v669 = vunpack.c.l.b16 %v328
        %v670 = vunpack.c.h.b16 %v328
        %v671 = vunpack.c.l.b16 %v329
        %v672 = vunpack.c.h.b16 %v329
        %v673 = vunpack.c.l.b16 %v330
        %v674 = vunpack.c.h.b16 %v330
        %v675 = vunpack.c.l.b16 %v331
        %v676 = vunpack.c.h.b16 %v331
        %v677 = vunpack.c.l.b16 %v332
        %v678 = vunpack.c.h.b16 %v332
        %v679 = vunpack.c.l.b16 %v333
        %v680 = vunpack.c.h.b16 %v333
        %v681 = vunpack.c.l.b16 %v334
        %v682 = vunpack.c.h.b16 %v334
        %v683 = vunpack.c.l.b16 %v335
        %v684 = vunpack.c.h.b16 %v335
        %v685 = vunpack.c.l.b16 %v336
        %v686 = vunpack.c.h.b16 %v336
        %v687 = vunpack.c.l.b16 %v337
        %v688 = vunpack.c.h.b16 %v337
        %v689 = vunpack.c.l.b16 %v338
        %v690 = vunpack.c.h.b16 %v338
        %v691 = vunpack.c.l.b16 %v339
        %v692 = vunpack.c.h.b16 %v339
        %v693 = vunpack.c.l.b16 %v340
        %v694 = vunpack.c.h.b16 %v340
        %v695 = vunpack.c.l.b16 %v341
        %v696 = vunpack.c.h.b16 %v341
        %v697 = vunpack.c.l.b16 %v342
        %v698 = vunpack.c.h.b16 %v342
        %v699 = vunpack.c.l.b16 %v343
        %v700 = vunpack.c.h.b16 %v343
        %v701 = vunpack.c.l.b16 %v344
        %v702 = vunpack.c.h.b16 %v344
        %v703 = vunpack.c.l.b16 %v345
        %v704 = vunpack.c.h.b16 %v345
        %v705 = vunpack.c.l.b16 %v346
        %v706 = vunpack.c.h.b16 %v346
        %v707 = vunpack.c.l.b16 %v347
        %v708 = vunpack.c.h.b16 %v347
        %v709 = vunpack.c.l.b16 %v348
        %v710 = vunpack.c.h.b16 %v348
        %v711 = vunpack.c.l.b16 %v349
        %v712 = vunpack.c.h.b16 %v349
        %v713 = vunpack.c.l.b16 %v350
        %v714 = vunpack.c.h.b16 %v350
        %v715 = vunpack.c.l.b16 %v351
        %v716 = vunpack.c.h.b16 %v351
        %v717 = vunpack.c.l.b16 %v352
        %v718 = vunpack.c.h.b16 %v352
        %v719 = vunpack.c.l.b16 %v353
        %v720 = vunpack.c.h.b16 %v353
        %v721 = vunpack.c.l.b16 %v354
        %v722 = vunpack.c.h.b16 %v354
        %v723 = vunpack.c.l.b16 %v355
        %v724 = vunpack.c.h.b16 %v355
        %v725 = vunpack.c.l.b16 %v356
        %v726 = vunpack.c.h.b16 %v356
        %v727 = vunpack.c.l.b16 %v357
        %v728 = vunpack.c.h.b16 %v357
        %v729 = vunpack.c.l.b16 %v358
        %v730 = vunpack.c.h.b16 %v358
        %v731 = vunpack.c.l.b16 %v359
        %v732 = vunpack.c.h.b16 %v359
        %v733 = vunpack.c.l.b16 %v360
        %v734 = vunpack.c.h.b16 %v360
        %v735 = vunpack.c.l.b16 %v361
        %v736 = vunpack.c.h.b16 %v361
        %v737 = vunpack.c.l.b16 %v362
        %v738 = vunpack.c.h.b16 %v362
        %v739 = vunpack.c.l.b16 %v363
        %v740 = vunpack.c.h.b16 %v363
        %v741 = vunpack.c.l.b16 %v364
        %v742 = vunpack.c.h.b16 %v364
        %v743 = vunpack.c.l.b16 %v365
        %v744 = vunpack.c.h.b16 %v365
        %v745 = vunpack.c.l.b16 %v366
        %v746 = vunpack.c.h.b16 %v366
        %v747 = vunpack.c.l.b16 %v367
        %v748 = vunpack.c.h.b16 %v367
        %v749 = vunpack.c.l.b16 %v368
        %v750 = vunpack.c.h.b16 %v368
        %v751 = vunpack.c.l.b16 %v369
        %v752 = vunpack.c.h.b16 %v369
        %v753 = vunpack.c.l.b16 %v370
        %v754 = vunpack.c.h.b16 %v370
        %v755 = vunpack.c.l.b16 %v371
        %v756 = vunpack.c.h.b16 %v371
        %v757 = vunpack.c.l.b16 %v372
        %v758 = vunpack.c.h.b16 %v372
        %v759 = vunpack.c.l.b16 %v373
        %v760 = vunpack.c.h.b16 %v373
        %v761 = vunpack.c.l.b16 %v374
        %v762 = vunpack.c.h.b16 %v374
        %v763 = vunpack.c.l.b16 %v375
        %v764 = vunpack.c.h.b16 %v375
        %v765 = vunpack.c.l.b16 %v376
        %v766 = vunpack.c.h.b16 %v376
        %v767 = vunpack.c.l.b16 %v377
        %v768 = vunpack.c.h.b16 %v377
        %v769 = vunpack.c.l.b16 %v378
        %v770 = vunpack.c.h.b16 %v378
        %v771 = vunpack.c.l.b16 %v379
        %v772 = vunpack.c.h.b16 %v379
        %v773 = vunpack.c.l.b16 %v380
        %v774 = vunpack.c.h.b16 %v380
        %v775 = vunpack.c.l.b16 %v381
        %v776 = vunpack.c.h.b16 %v381
        %v777 = vunpack.c.l.b16 %v382
        %v778 = vunpack.c.h.b16 %v382
        %v779 = vunpack.c.l.b16 %v383
        %v780 = vunpack.c.h.b16 %v383
        %v781 = vunpack.c.l.b16 %v384
        %v782 = vunpack.c.h.b16 %v384
        %v783 = vunpack.c.l.b16 %v385
        %v784 = vunpack.c.h.b16 %v385
        %v785 = vunpack.c.l.b16 %v386
        %v786 = vunpack.c.h.b16 %v386
        %v787 = vunpack.c.l.b16 %v387
        %v788 = vunpack.c.h.b16 %v387
        %v789 = vunpack.c.l.b16 %v388
        %v790 = vunpack.c.h.b16 %v388
        %v791 = vunpack.c.l.b16 %v389
        %v792 = vunpack.c.h.b16 %v389
        %v793 = vpack.c.b16 %v539, %v537
        %v794 = vpack.c.b16 %v540, %v538
        %v795 = vpack.c.b16 %v543, %v541
        %v796 = vpack.c.b16 %v544, %v542
        %v797 = vpack.c.b16 %v547, %v545
        %v798 = vpack.c.b16 %v548, %v546
        %v799 = vpack.c.b16 %v551, %v549
        %v800 = vpack.c.b16 %v552, %v550
        %v801 = vpack.c.b16 %v555, %v553
        %v802 = vpack.c.b16 %v556, %v554
        %v803 = vpack.c.b16 %v559, %v557
        %v804 = vpack.c.b16 %v560, %v558
        %v805 = vpack.c.b16 %v563, %v561
        %v806 = vpack.c.b16 %v564, %v562
        %v807 = vpack.c.b16 %v567, %v565
        %v808 = vpack.c.b16 %v568, %v566
        %v809 = vpack.c.b16 %v571, %v569
        %v810 = vpack.c.b16 %v572, %v570
        %v811 = vpack.c.b16 %v575, %v573
        %v812 = vpack.c.b16 %v576, %v574
        %v813 = vpack.c.b16 %v579, %v577
        %v814 = vpack.c.b16 %v580, %v578
        %v815 = vpack.c.b16 %v583, %v581
        %v816 = vpack.c.b16 %v584, %v582
        %v817 = vpack.c.b16 %v587, %v585
        %v818 = vpack.c.b16 %v588, %v586
        %v819 = vpack.c.b16 %v591, %v589
        %v820 = vpack.c.b16 %v592, %v590
        %v821 = vpack.c.b16 %v595, %v593
        %v822 = vpack.c.b16 %v596, %v594
        %v823 = vpack.c.b16 %v599, %v597
        %v824 = vpack.c.b16 %v600, %v598
        %v825 = vpack.c.b16 %v603, %v601
        %v826 = vpack.c.b16 %v604, %v602
        %v827 = vpack.c.b16 %v607, %v605
        %v828 = vpack.c.b16 %v608, %v606
        %v829 = vpack.c.b16 %v611, %v609
        %v830 = vpack.c.b16 %v612, %v610
        %v831 = vpack.c.b16 %v615, %v613
        %v832 = vpack.c.b16 %v616, %v614
        %v833 = vpack.c.b16 %v619, %v617
        %v834 = vpack.c.b16 %v620, %v618
        %v835 = vpack.c.b16 %v623, %v621
        %v836 = vpack.c.b16 %v624, %v622
        %v837 = vpack.c.b16 %v627, %v625
        %v838 = vpack.c.b16 %v628, %v626
        %v839 = vpack.c.b16 %v631, %v629
        %v840 = vpack.c.b16 %v632, %v630
        %v841 = vpack.c.b16 %v635, %v633
        %v842 = vpack.c.b16 %v636, %v634
        %v843 = vpack.c.b16 %v639, %v637
        %v844 = vpack.c.b16 %v640, %v638
        %v845 = vpack.c.b16 %v643, %v641
        %v846 = vpack.c.b16 %v644, %v642
        %v847 = vpack.c.b16 %v647, %v645
        %v848 = vpack.c.b16 %v648, %v646
        %v849 = vpack.c.b16 %v651, %v649
        %v850 = vpack.c.b16 %v652, %v650
        %v851 = vpack.c.b16 %v655, %v653
        %v852 = vpack.c.b16 %v656, %v654
        %v853 = vpack.c.b16 %v659, %v657
        %v854 = vpack.c.b16 %v660, %v658
        %v855 = vpack.c.b16 %v663, %v661
        %v856 = vpack.c.b16 %v664, %v662
        %v857 = vpack.c.b16 %v667, %v665
        %v858 = vpack.c.b16 %v668, %v666
        %v859 = vpack.c.b16 %v671, %v669
        %v860 = vpack.c.b16 %v672, %v670
        %v861 = vpack.c.b16 %v675, %v673
        %v862 = vpack.c.b16 %v676, %v674
        %v863 = vpack.c.b16 %v679, %v677
        %v864 = vpack.c.b16 %v680, %v678
        %v865 = vpack.c.b16 %v683, %v681
        %v866 = vpack.c.b16 %v684, %v682
        %v867 = vpack.c.b16 %v687, %v685
        %v868 = vpack.c.b16 %v688, %v686
        %v869 = vpack.c.b16 %v691, %v689
        %v870 = vpack.c.b16 %v692, %v690
        %v871 = vpack.c.b16 %v695, %v693
        %v872 = vpack.c.b16 %v696, %v694
        %v873 = vpack.c.b16 %v699, %v697
        %v874 = vpack.c.b16 %v700, %v698
        %v875 = vpack.c.b16 %v703, %v701
        %v876 = vpack.c.b16 %v704, %v702
        %v877 = vpack.c.b16 %v707, %v705
        %v878 = vpack.c.b16 %v708, %v706
        %v879 = vpack.c.b16 %v711, %v709
        %v880 = vpack.c.b16 %v712, %v710
        %v881 = vpack.c.b16 %v715, %v713
        %v882 = vpack.c.b16 %v716, %v714
        %v883 = vpack.c.b16 %v719, %v717
        %v884 = vpack.c.b16 %v720, %v718
        %v885 = vpack.c.b16 %v723, %v721
        %v886 = vpack.c.b16 %v724, %v722
        %v887 = vpack.c.b16 %v727, %v725
        %v888 = vpack.c.b16 %v728, %v726
        %v889 = vpack.c.b16 %v731, %v729
        %v890 = vpack.c.b16 %v732, %v730
        %v891 = vpack.c.b16 %v735, %v733
        %v892 = vpack.c.b16 %v736, %v734
        %v893 = vpack.c.b16 %v739, %v737
        %v894 = vpack.c.b16 %v740, %v738
        %v895 = vpack.c.b16 %v743, %v741
        %v896 = vpack.c.b16 %v744, %v742
        %v897 = vpack.c.b16 %v747, %v745
        %v898 = vpack.c.b16 %v748, %v746
        %v899 = vpack.c.b16 %v751, %v749
        %v900 = vpack.c.b16 %v752, %v750
        %v901 = vpack.c.b16 %v755, %v753
        %v902 = vpack.c.b16 %v756, %v754
        %v903 = vpack.c.b16 %v759, %v757
        %v904 = vpack.c.b16 %v760, %v758
        %v905 = vpack.c.b16 %v763, %v761
        %v906 = vpack.c.b16 %v764, %v762
        %v907 = vpack.c.b16 %v767, %v765
        %v908 = vpack.c.b16 %v768, %v766
        %v909 = vpack.c.b16 %v771, %v769
        %v910 = vpack.c.b16 %v772, %v770
        %v911 = vpack.c.b16 %v775, %v773
        %v912 = vpack.c.b16 %v776, %v774
        %v913 = vpack.c.b16 %v779, %v777
        %v914 = vpack.c.b16 %v780, %v778
        %v915 = vpack.c.b16 %v783, %v781
        %v916 = vpack.c.b16 %v784, %v782
        %v917 = vpack.c.b16 %v787, %v785
        %v918 = vpack.c.b16 %v788, %v786
        %v919 = vpack.c.b16 %v791, %v789
        %v920 = vpack.c.b16 %v792, %v790
        %v1004 = vunpack.c.l.b16 %v390
        %v1005 = vunpack.c.l.b16 %v391
        %v1006 = vunpack.c.l.b16 %v392
        %v1007 = vunpack.c.l.b16 %v393
        %v1008 = vunpack.c.l.b16 %v394
        %v1009 = vunpack.c.l.b16 %v395
        %v1010 = vunpack.c.l.b16 %v396
        %v1011 = vunpack.c.l.b16 %v397
        %v1012 = vunpack.c.l.b16 %v398
        %v1013 = vunpack.c.l.b16 %v399
        %v1014 = vunpack.c.l.b16 %v400
        %v1015 = vunpack.c.l.b16 %v401
        %v1016 = vunpack.c.l.b16 %v402
        %v1017 = vunpack.c.l.b16 %v403
        %v1018 = vunpack.c.l.b16 %v404
        %v1019 = vunpack.c.l.b16 %v405
        %v1020 = vunpack.c.l.b16 %v406
        %v1021 = vunpack.c.l.b16 %v407
        %v1022 = vunpack.c.l.b16 %v408
        %v1023 = vpack.c.b16 %v1005, %v1004
        %v1024 = vpack.c.b16 %v1007, %v1006
        %v1025 = vpack.c.b16 %v1009, %v1008
        %v1026 = vpack.c.b16 %v1011, %v1010
        %v1027 = vpack.c.b16 %v1013, %v1012
        %v1028 = vpack.c.b16 %v1015, %v1014
        %v1029 = vpack.c.b16 %v1017, %v1016
        %v1030 = vpack.c.b16 %v1019, %v1018
        %v1031 = vpack.c.b16 %v1021, %v1020
        %v1032 = vpack.c.b16 %v1022, %v1022
        %vm1042 = vcmask 154624
        %v1044 = vsel %vm1042, %v794, 0
        %v1047 = vsel %vm1042, %v796, 0
        %v1050 = vsel %vm1042, %v798, 0
        %v1053 = vsel %vm1042, %v800, 0
        %v1056 = vsel %vm1042, %v802, 0
        %v1059 = vsel %vm1042, %v804, 0
        %v1062 = vsel %vm1042, %v806, 0
        %v1065 = vsel %vm1042, %v808, 0
        %v1068 = vsel %vm1042, %v810, 0
        %v1071 = vsel %vm1042, %v812, 0
        %v1074 = vsel %vm1042, %v814, 0
        %v1077 = vsel %vm1042, %v816, 0
        %v1080 = vsel %vm1042, %v818, 0
        %v1083 = vsel %vm1042, %v820, 0
        %v1086 = vsel %vm1042, %v822, 0
        %v1089 = vsel %vm1042, %v824, 0
        %v1092 = vsel %vm1042, %v826, 0
        %v1095 = vsel %vm1042, %v828, 0
        %v1098 = vsel %vm1042, %v830, 0
        %v1101 = vsel %vm1042, %v832, 0
        %v1104 = vsel %vm1042, %v834, 0
        %v1107 = vsel %vm1042, %v836, 0
        %v1110 = vsel %vm1042, %v838, 0
        %v1113 = vsel %vm1042, %v840, 0
        %v1116 = vsel %vm1042, %v842, 0
        %v1119 = vsel %vm1042, %v844, 0
        %v1122 = vsel %vm1042, %v846, 0
        %v1125 = vsel %vm1042, %v848, 0
        %v1128 = vsel %vm1042, %v850, 0
        %v1131 = vsel %vm1042, %v852, 0
        %v1134 = vsel %vm1042, %v854, 0
        %v1137 = vsel %vm1042, %v856, 0
        %v1140 = vsel %vm1042, %v858, 0
        %v1143 = vsel %vm1042, %v860, 0
        %v1146 = vsel %vm1042, %v862, 0
        %v1149 = vsel %vm1042, %v864, 0
        %v1152 = vsel %vm1042, %v866, 0
        %v1155 = vsel %vm1042, %v868, 0
        %v1158 = vsel %vm1042, %v870, 0
        %v1161 = vsel %vm1042, %v872, 0
        %v1164 = vsel %vm1042, %v874, 0
        %v1167 = vsel %vm1042, %v876, 0
        %v1170 = vsel %vm1042, %v878, 0
        %v1173 = vsel %vm1042, %v880, 0
        %v1176 = vsel %vm1042, %v882, 0
        %v1179 = vsel %vm1042, %v884, 0
        %v1182 = vsel %vm1042, %v886, 0
        %v1185 = vsel %vm1042, %v888, 0
        %v1188 = vsel %vm1042, %v890, 0
        %v1191 = vsel %vm1042, %v892, 0
        %v1194 = vsel %vm1042, %v894, 0
        %v1197 = vsel %vm1042, %v896, 0
        %v1200 = vsel %vm1042, %v898, 0
        %v1203 = vsel %vm1042, %v900, 0
        %v1206 = vsel %vm1042, %v902, 0
        %v1209 = vsel %vm1042, %v904, 0
        %v1212 = vsel %vm1042, %v906, 0
        %v1215 = vsel %vm1042, %v908, 0
        %v1218 = vsel %vm1042, %v910, 0
        %v1221 = vsel %vm1042, %v912, 0
        %v1224 = vsel %vm1042, %v914, 0
        %v1227 = vsel %vm1042, %v916, 0
        %v1230 = vsel %vm1042, %v918, 0
        %v1233 = vsel %vm1042, %v920, 0
        %vm1235 = vcmask 1040384
        %vm1236 = vcmask 1041408
        %v1237 = vsel %vm1235, 4294967295, 65535
        %v1238 = vsel %vm1236, %v1237, 0
        %v1240 = vand.u32 %v1032, %v1238
        %1242 = vmatprep.subr.bf16.mxu0 0
        %1243 = vmatpush1.bf16.msra.mxu0 %v1023
        %1244 = vmatprep.subr.bf16.mxu0 0
        %1245 = vmatpush1.bf16.msra.mxu0 %v1024
        %1246 = vmatprep.subr.bf16.mxu0 0
        %1247 = vmatpush1.bf16.msra.mxu0 %v1025
        %1248 = vmatprep.subr.bf16.mxu0 0
        %1249 = vmatpush1.bf16.msra.mxu0 %v1026
        %1250 = vmatprep.subr.bf16.mxu0 0
        %1251 = vmatpush1.bf16.msra.mxu0 %v1027
        %1252 = vmatprep.subr.bf16.mxu0 0
        %1253 = vmatpush1.bf16.msra.mxu0 %v1028
        %1254 = vmatprep.subr.bf16.mxu0 0
        %1255 = vmatpush1.bf16.msra.mxu0 %v1029
        %1256 = vmatprep.subr.bf16.mxu0 0
        %1257 = vmatpush1.bf16.msra.mxu0 %v1030
        %1258 = vmatprep.subr.bf16.mxu0 0
        %1259 = vmatpush1.bf16.msra.mxu0 %v1031
        %1260 = vmatprep.subr.bf16.mxu0 0
        %1261 = vmatpush1.bf16.msra.mxu0 %v1240
        %1262 = vmatprep.subr.bf16.mxu0 0
        %1263 = vmatpush1.bf16.msra.mxu0 0
        %1264 = vmatprep.subr.bf16.mxu0 0
        %1265 = vmatpush1.bf16.msra.mxu0 0
        %1266 = vmatprep.subr.bf16.mxu0 0
        %1267 = vmatpush1.bf16.msra.mxu0 0
        %1268 = vmatprep.subr.bf16.mxu0 0
        %1269 = vmatpush1.bf16.msra.mxu0 0
        %1270 = vmatprep.subr.bf16.mxu0 0
        %1271 = vmatpush1.bf16.msra.mxu0 0
        %1272 = vmatprep.subr.bf16.mxu0 0
        %1273 = vmatpush1.bf16.msra.mxu0 0
        %1274 = vmatprep.mubr.bf16.mxu0 %v1044
        %1275 = vmatmul.mubr.bf16.gmra.mrb[0].mxu0 %v793
        %v1276 = vpop.f32.mrb[0].mxu0
        %v1277 = vadd.f32 0.0, %v1276
        %v1278 = vpop.f32.mrb[0].mxu0
        %v1279 = vpop.f32.mrb[0].mxu0
        %v1280 = vadd.f32 0.0, %v1279
        %v1281 = vpop.f32.mrb[0].mxu0
        %1282 = vmatprep.mubr.bf16.mxu0 %v1047
        %1283 = vmatmul.mubr.bf16.gmra.mrb[0].mxu0 %v795
        %v1284 = vpop.f32.mrb[0].mxu0
        %v1285 = vadd.f32 0.0, %v1284
        %v1286 = vpop.f32.mrb[0].mxu0
        %v1287 = vpop.f32.mrb[0].mxu0
        %v1288 = vadd.f32 0.0, %v1287
        %v1289 = vpop.f32.mrb[0].mxu0
        %1290 = vmatprep.mubr.bf16.mxu0 %v1050
        %1291 = vmatmul.mubr.bf16.gmra.mrb[0].mxu0 %v797
        %v1292 = vpop.f32.mrb[0].mxu0
        %v1293 = vadd.f32 0.0, %v1292
        %v1294 = vpop.f32.mrb[0].mxu0
        %v1295 = vpop.f32.mrb[0].mxu0
        %v1296 = vadd.f32 0.0, %v1295
        %v1297 = vpop.f32.mrb[0].mxu0
        %1298 = vmatprep.mubr.bf16.mxu0 %v1053
        %1299 = vmatmul.mubr.bf16.gmra.mrb[0].mxu0 %v799
        %v1300 = vpop.f32.mrb[0].mxu0
        %v1301 = vadd.f32 0.0, %v1300
        %v1302 = vpop.f32.mrb[0].mxu0
        %v1303 = vpop.f32.mrb[0].mxu0
        %v1304 = vadd.f32 0.0, %v1303
        %v1305 = vpop.f32.mrb[0].mxu0
        %1306 = vmatprep.mubr.bf16.mxu0 %v1056
        %1307 = vmatmul.mubr.bf16.gmra.mrb[0].mxu0 %v801
        %v1308 = vpop.f32.mrb[0].mxu0
        %v1309 = vadd.f32 0.0, %v1308
        %v1310 = vpop.f32.mrb[0].mxu0
        %v1311 = vpop.f32.mrb[0].mxu0
        %v1312 = vadd.f32 0.0, %v1311
        %v1313 = vpop.f32.mrb[0].mxu0
        %1314 = vmatprep.mubr.bf16.mxu0 %v1059
        %1315 = vmatmul.mubr.bf16.gmra.mrb[0].mxu0 %v803
        %v1316 = vpop.f32.mrb[0].mxu0
        %v1317 = vadd.f32 0.0, %v1316
        %v1318 = vpop.f32.mrb[0].mxu0
        %v1319 = vpop.f32.mrb[0].mxu0
        %v1320 = vadd.f32 0.0, %v1319
        %v1321 = vpop.f32.mrb[0].mxu0
        %1322 = vmatprep.mubr.bf16.mxu0 %v1062
        %1323 = vmatmul.mubr.bf16.gmra.mrb[0].mxu0 %v805
        %v1324 = vpop.f32.mrb[0].mxu0
        %v1325 = vadd.f32 0.0, %v1324
        %v1326 = vpop.f32.mrb[0].mxu0
        %v1327 = vpop.f32.mrb[0].mxu0
        %v1328 = vadd.f32 0.0, %v1327
        %v1329 = vpop.f32.mrb[0].mxu0
        %1330 = vmatprep.mubr.bf16.mxu0 %v1065
        %1331 = vmatmul.mubr.bf16.gmra.mrb[0].mxu0 %v807
        %v1332 = vpop.f32.mrb[0].mxu0
        %v1333 = vadd.f32 0.0, %v1332
        %v1334 = vpop.f32.mrb[0].mxu0
        %v1335 = vpop.f32.mrb[0].mxu0
        %v1336 = vadd.f32 0.0, %v1335
        %v1337 = vpop.f32.mrb[0].mxu0
        %1338 = vmatprep.mubr.bf16.mxu0 %v1068
        %1339 = vmatmul.mubr.bf16.gmra.mrb[0].mxu0 %v809
        %v1340 = vpop.f32.mrb[0].mxu0
        %v1341 = vadd.f32 0.0, %v1340
        %v1342 = vpop.f32.mrb[0].mxu0
        %v1343 = vpop.f32.mrb[0].mxu0
        %v1344 = vadd.f32 0.0, %v1343
        %v1345 = vpop.f32.mrb[0].mxu0
        %1346 = vmatprep.mubr.bf16.mxu0 %v1071
        %1347 = vmatmul.mubr.bf16.gmra.mrb[0].mxu0 %v811
        %v1348 = vpop.f32.mrb[0].mxu0
        %v1349 = vadd.f32 0.0, %v1348
        %v1350 = vpop.f32.mrb[0].mxu0
        %v1351 = vpop.f32.mrb[0].mxu0
        %v1352 = vadd.f32 0.0, %v1351
        %v1353 = vpop.f32.mrb[0].mxu0
        %1354 = vmatprep.mubr.bf16.mxu0 %v1074
        %1355 = vmatmul.mubr.bf16.gmra.mrb[0].mxu0 %v813
        %v1356 = vpop.f32.mrb[0].mxu0
        %v1357 = vadd.f32 0.0, %v1356
        %v1358 = vpop.f32.mrb[0].mxu0
        %v1359 = vpop.f32.mrb[0].mxu0
        %v1360 = vadd.f32 0.0, %v1359
        %v1361 = vpop.f32.mrb[0].mxu0
        %1362 = vmatprep.mubr.bf16.mxu0 %v1077
        %1363 = vmatmul.mubr.bf16.gmra.mrb[0].mxu0 %v815
        %v1364 = vpop.f32.mrb[0].mxu0
        %v1365 = vadd.f32 0.0, %v1364
        %v1366 = vpop.f32.mrb[0].mxu0
        %v1367 = vpop.f32.mrb[0].mxu0
        %v1368 = vadd.f32 0.0, %v1367
        %v1369 = vpop.f32.mrb[0].mxu0
        %1370 = vmatprep.mubr.bf16.mxu0 %v1080
        %1371 = vmatmul.mubr.bf16.gmra.mrb[0].mxu0 %v817
        %v1372 = vpop.f32.mrb[0].mxu0
        %v1373 = vadd.f32 0.0, %v1372
        %v1374 = vpop.f32.mrb[0].mxu0
        %v1375 = vpop.f32.mrb[0].mxu0
        %v1376 = vadd.f32 0.0, %v1375
        %v1377 = vpop.f32.mrb[0].mxu0
        %1378 = vmatprep.mubr.bf16.mxu0 %v1083
        %1379 = vmatmul.mubr.bf16.gmra.mrb[0].mxu0 %v819
        %v1380 = vpop.f32.mrb[0].mxu0
        %v1381 = vadd.f32 0.0, %v1380
        %v1382 = vpop.f32.mrb[0].mxu0
        %v1383 = vpop.f32.mrb[0].mxu0
        %v1384 = vadd.f32 0.0, %v1383
        %v1385 = vpop.f32.mrb[0].mxu0
        %1386 = vmatprep.mubr.bf16.mxu0 %v1086
        %1387 = vmatmul.mubr.bf16.gmra.mrb[0].mxu0 %v821
        %v1388 = vpop.f32.mrb[0].mxu0
        %v1389 = vadd.f32 0.0, %v1388
        %v1390 = vpop.f32.mrb[0].mxu0
        %v1391 = vpop.f32.mrb[0].mxu0
        %v1392 = vadd.f32 0.0, %v1391
        %v1393 = vpop.f32.mrb[0].mxu0
        %1394 = vmatprep.mubr.bf16.mxu0 %v1089
        %1395 = vmatmul.mubr.bf16.gmra.mrb[0].mxu0 %v823
        %v1396 = vpop.f32.mrb[0].mxu0
        %v1397 = vadd.f32 0.0, %v1396
        %v1398 = vpop.f32.mrb[0].mxu0
        %v1399 = vpop.f32.mrb[0].mxu0
        %v1400 = vadd.f32 0.0, %v1399
        %v1401 = vpop.f32.mrb[0].mxu0
        %1402 = vmatprep.mubr.bf16.mxu0 %v1092
        %1403 = vmatmul.mubr.bf16.gmra.mrb[0].mxu0 %v825
        %v1404 = vpop.f32.mrb[0].mxu0
        %v1405 = vadd.f32 0.0, %v1404
        %v1406 = vpop.f32.mrb[0].mxu0
        %v1407 = vpop.f32.mrb[0].mxu0
        %v1408 = vadd.f32 0.0, %v1407
        %v1409 = vpop.f32.mrb[0].mxu0
        %1410 = vmatprep.mubr.bf16.mxu0 %v1095
        %1411 = vmatmul.mubr.bf16.gmra.mrb[0].mxu0 %v827
        %v1412 = vpop.f32.mrb[0].mxu0
        %v1413 = vadd.f32 0.0, %v1412
        %v1414 = vpop.f32.mrb[0].mxu0
        %v1415 = vpop.f32.mrb[0].mxu0
        %v1416 = vadd.f32 0.0, %v1415
        %v1417 = vpop.f32.mrb[0].mxu0
        %1418 = vmatprep.mubr.bf16.mxu0 %v1098
        %1419 = vmatmul.mubr.bf16.gmra.mrb[0].mxu0 %v829
        %v1420 = vpop.f32.mrb[0].mxu0
        %v1421 = vadd.f32 0.0, %v1420
        %v1422 = vpop.f32.mrb[0].mxu0
        %v1423 = vpop.f32.mrb[0].mxu0
        %v1424 = vadd.f32 0.0, %v1423
        %v1425 = vpop.f32.mrb[0].mxu0
        %1426 = vmatprep.mubr.bf16.mxu0 %v1101
        %1427 = vmatmul.mubr.bf16.gmra.mrb[0].mxu0 %v831
        %v1428 = vpop.f32.mrb[0].mxu0
        %v1429 = vadd.f32 0.0, %v1428
        %v1430 = vpop.f32.mrb[0].mxu0
        %v1431 = vpop.f32.mrb[0].mxu0
        %v1432 = vadd.f32 0.0, %v1431
        %v1433 = vpop.f32.mrb[0].mxu0
        %1434 = vmatprep.mubr.bf16.mxu0 %v1104
        %1435 = vmatmul.mubr.bf16.gmra.mrb[0].mxu0 %v833
        %v1436 = vpop.f32.mrb[0].mxu0
        %v1437 = vadd.f32 0.0, %v1436
        %v1438 = vpop.f32.mrb[0].mxu0
        %v1439 = vpop.f32.mrb[0].mxu0
        %v1440 = vadd.f32 0.0, %v1439
        %v1441 = vpop.f32.mrb[0].mxu0
        %1442 = vmatprep.mubr.bf16.mxu0 %v1107
        %1443 = vmatmul.mubr.bf16.gmra.mrb[0].mxu0 %v835
        %v1444 = vpop.f32.mrb[0].mxu0
        %v1445 = vadd.f32 0.0, %v1444
        %v1446 = vpop.f32.mrb[0].mxu0
        %v1447 = vpop.f32.mrb[0].mxu0
        %v1448 = vadd.f32 0.0, %v1447
        %v1449 = vpop.f32.mrb[0].mxu0
        %1450 = vmatprep.mubr.bf16.mxu0 %v1110
        %1451 = vmatmul.mubr.bf16.gmra.mrb[0].mxu0 %v837
        %v1452 = vpop.f32.mrb[0].mxu0
        %v1453 = vadd.f32 0.0, %v1452
        %v1454 = vpop.f32.mrb[0].mxu0
        %v1455 = vpop.f32.mrb[0].mxu0
        %v1456 = vadd.f32 0.0, %v1455
        %v1457 = vpop.f32.mrb[0].mxu0
        %1458 = vmatprep.mubr.bf16.mxu0 %v1113
        %1459 = vmatmul.mubr.bf16.gmra.mrb[0].mxu0 %v839
        %v1460 = vpop.f32.mrb[0].mxu0
        %v1461 = vadd.f32 0.0, %v1460
        %v1462 = vpop.f32.mrb[0].mxu0
        %v1463 = vpop.f32.mrb[0].mxu0
        %v1464 = vadd.f32 0.0, %v1463
        %v1465 = vpop.f32.mrb[0].mxu0
        %1466 = vmatprep.mubr.bf16.mxu0 %v1116
        %1467 = vmatmul.mubr.bf16.gmra.mrb[0].mxu0 %v841
        %v1468 = vpop.f32.mrb[0].mxu0
        %v1469 = vadd.f32 0.0, %v1468
        %v1470 = vpop.f32.mrb[0].mxu0
        %v1471 = vpop.f32.mrb[0].mxu0
        %v1472 = vadd.f32 0.0, %v1471
        %v1473 = vpop.f32.mrb[0].mxu0
        %1474 = vmatprep.mubr.bf16.mxu0 %v1119
        %1475 = vmatmul.mubr.bf16.gmra.mrb[0].mxu0 %v843
        %v1476 = vpop.f32.mrb[0].mxu0
        %v1477 = vadd.f32 0.0, %v1476
        %v1478 = vpop.f32.mrb[0].mxu0
        %v1479 = vpop.f32.mrb[0].mxu0
        %v1480 = vadd.f32 0.0, %v1479
        %v1481 = vpop.f32.mrb[0].mxu0
        %1482 = vmatprep.mubr.bf16.mxu0 %v1122
        %1483 = vmatmul.mubr.bf16.gmra.mrb[0].mxu0 %v845
        %v1484 = vpop.f32.mrb[0].mxu0
        %v1485 = vadd.f32 0.0, %v1484
        %v1486 = vpop.f32.mrb[0].mxu0
        %v1487 = vpop.f32.mrb[0].mxu0
        %v1488 = vadd.f32 0.0, %v1487
        %v1489 = vpop.f32.mrb[0].mxu0
        %1490 = vmatprep.mubr.bf16.mxu0 %v1125
        %1491 = vmatmul.mubr.bf16.gmra.mrb[0].mxu0 %v847
        %v1492 = vpop.f32.mrb[0].mxu0
        %v1493 = vadd.f32 0.0, %v1492
        %v1494 = vpop.f32.mrb[0].mxu0
        %v1495 = vpop.f32.mrb[0].mxu0
        %v1496 = vadd.f32 0.0, %v1495
        %v1497 = vpop.f32.mrb[0].mxu0
        %1498 = vmatprep.mubr.bf16.mxu0 %v1128
        %1499 = vmatmul.mubr.bf16.gmra.mrb[0].mxu0 %v849
        %v1500 = vpop.f32.mrb[0].mxu0
        %v1501 = vadd.f32 0.0, %v1500
        %v1502 = vpop.f32.mrb[0].mxu0
        %v1503 = vpop.f32.mrb[0].mxu0
        %v1504 = vadd.f32 0.0, %v1503
        %v1505 = vpop.f32.mrb[0].mxu0
        %1506 = vmatprep.mubr.bf16.mxu0 %v1131
        %1507 = vmatmul.mubr.bf16.gmra.mrb[0].mxu0 %v851
        %v1508 = vpop.f32.mrb[0].mxu0
        %v1509 = vadd.f32 0.0, %v1508
        %v1510 = vpop.f32.mrb[0].mxu0
        %v1511 = vpop.f32.mrb[0].mxu0
        %v1512 = vadd.f32 0.0, %v1511
        %v1513 = vpop.f32.mrb[0].mxu0
        %1514 = vmatprep.mubr.bf16.mxu0 %v1134
        %1515 = vmatmul.mubr.bf16.gmra.mrb[0].mxu0 %v853
        %v1516 = vpop.f32.mrb[0].mxu0
        %v1517 = vadd.f32 0.0, %v1516
        %v1518 = vpop.f32.mrb[0].mxu0
        %v1519 = vpop.f32.mrb[0].mxu0
        %v1520 = vadd.f32 0.0, %v1519
        %v1521 = vpop.f32.mrb[0].mxu0
        %1522 = vmatprep.mubr.bf16.mxu0 %v1137
        %1523 = vmatmul.mubr.bf16.gmra.mrb[0].mxu0 %v855
        %v1524 = vpop.f32.mrb[0].mxu0
        %v1525 = vadd.f32 0.0, %v1524
        %v1526 = vpop.f32.mrb[0].mxu0
        %v1527 = vpop.f32.mrb[0].mxu0
        %v1528 = vadd.f32 0.0, %v1527
        %v1529 = vpop.f32.mrb[0].mxu0
        %1530 = vmatprep.mubr.bf16.mxu0 %v1140
        %1531 = vmatmul.mubr.bf16.gmra.mrb[0].mxu0 %v857
        %v1532 = vpop.f32.mrb[0].mxu0
        %v1533 = vadd.f32 0.0, %v1532
        %v1534 = vpop.f32.mrb[0].mxu0
        %v1535 = vpop.f32.mrb[0].mxu0
        %v1536 = vadd.f32 0.0, %v1535
        %v1537 = vpop.f32.mrb[0].mxu0
        %1538 = vmatprep.mubr.bf16.mxu0 %v1143
        %1539 = vmatmul.mubr.bf16.gmra.mrb[0].mxu0 %v859
        %v1540 = vpop.f32.mrb[0].mxu0
        %v1541 = vadd.f32 0.0, %v1540
        %v1542 = vpop.f32.mrb[0].mxu0
        %v1543 = vpop.f32.mrb[0].mxu0
        %v1544 = vadd.f32 0.0, %v1543
        %v1545 = vpop.f32.mrb[0].mxu0
        %1546 = vmatprep.mubr.bf16.mxu0 %v1146
        %1547 = vmatmul.mubr.bf16.gmra.mrb[0].mxu0 %v861
        %v1548 = vpop.f32.mrb[0].mxu0
        %v1549 = vadd.f32 0.0, %v1548
        %v1550 = vpop.f32.mrb[0].mxu0
        %v1551 = vpop.f32.mrb[0].mxu0
        %v1552 = vadd.f32 0.0, %v1551
        %v1553 = vpop.f32.mrb[0].mxu0
        %1554 = vmatprep.mubr.bf16.mxu0 %v1149
        %1555 = vmatmul.mubr.bf16.gmra.mrb[0].mxu0 %v863
        %v1556 = vpop.f32.mrb[0].mxu0
        %v1557 = vadd.f32 0.0, %v1556
        %v1558 = vpop.f32.mrb[0].mxu0
        %v1559 = vpop.f32.mrb[0].mxu0
        %v1560 = vadd.f32 0.0, %v1559
        %v1561 = vpop.f32.mrb[0].mxu0
        %1562 = vmatprep.mubr.bf16.mxu0 %v1152
        %1563 = vmatmul.mubr.bf16.gmra.mrb[0].mxu0 %v865
        %v1564 = vpop.f32.mrb[0].mxu0
        %v1565 = vadd.f32 0.0, %v1564
        %v1566 = vpop.f32.mrb[0].mxu0
        %v1567 = vpop.f32.mrb[0].mxu0
        %v1568 = vadd.f32 0.0, %v1567
        %v1569 = vpop.f32.mrb[0].mxu0
        %1570 = vmatprep.mubr.bf16.mxu0 %v1155
        %1571 = vmatmul.mubr.bf16.gmra.mrb[0].mxu0 %v867
        %v1572 = vpop.f32.mrb[0].mxu0
        %v1573 = vadd.f32 0.0, %v1572
        %v1574 = vpop.f32.mrb[0].mxu0
        %v1575 = vpop.f32.mrb[0].mxu0
        %v1576 = vadd.f32 0.0, %v1575
        %v1577 = vpop.f32.mrb[0].mxu0
        %1578 = vmatprep.mubr.bf16.mxu0 %v1158
        %1579 = vmatmul.mubr.bf16.gmra.mrb[0].mxu0 %v869
        %v1580 = vpop.f32.mrb[0].mxu0
        %v1581 = vadd.f32 0.0, %v1580
        %v1582 = vpop.f32.mrb[0].mxu0
        %v1583 = vpop.f32.mrb[0].mxu0
        %v1584 = vadd.f32 0.0, %v1583
        %v1585 = vpop.f32.mrb[0].mxu0
        %1586 = vmatprep.mubr.bf16.mxu0 %v1161
        %1587 = vmatmul.mubr.bf16.gmra.mrb[0].mxu0 %v871
        %v1588 = vpop.f32.mrb[0].mxu0
        %v1589 = vadd.f32 0.0, %v1588
        %v1590 = vpop.f32.mrb[0].mxu0
        %v1591 = vpop.f32.mrb[0].mxu0
        %v1592 = vadd.f32 0.0, %v1591
        %v1593 = vpop.f32.mrb[0].mxu0
        %1594 = vmatprep.mubr.bf16.mxu0 %v1164
        %1595 = vmatmul.mubr.bf16.gmra.mrb[0].mxu0 %v873
        %v1596 = vpop.f32.mrb[0].mxu0
        %v1597 = vadd.f32 0.0, %v1596
        %v1598 = vpop.f32.mrb[0].mxu0
        %v1599 = vpop.f32.mrb[0].mxu0
        %v1600 = vadd.f32 0.0, %v1599
        %v1601 = vpop.f32.mrb[0].mxu0
        %1602 = vmatprep.mubr.bf16.mxu0 %v1167
        %1603 = vmatmul.mubr.bf16.gmra.mrb[0].mxu0 %v875
        %v1604 = vpop.f32.mrb[0].mxu0
        %v1605 = vadd.f32 0.0, %v1604
        %v1606 = vpop.f32.mrb[0].mxu0
        %v1607 = vpop.f32.mrb[0].mxu0
        %v1608 = vadd.f32 0.0, %v1607
        %v1609 = vpop.f32.mrb[0].mxu0
        %1610 = vmatprep.mubr.bf16.mxu0 %v1170
        %1611 = vmatmul.mubr.bf16.gmra.mrb[0].mxu0 %v877
        %v1612 = vpop.f32.mrb[0].mxu0
        %v1613 = vadd.f32 0.0, %v1612
        %v1614 = vpop.f32.mrb[0].mxu0
        %v1615 = vpop.f32.mrb[0].mxu0
        %v1616 = vadd.f32 0.0, %v1615
        %v1617 = vpop.f32.mrb[0].mxu0
        %1618 = vmatprep.mubr.bf16.mxu0 %v1173
        %1619 = vmatmul.mubr.bf16.gmra.mrb[0].mxu0 %v879
        %v1620 = vpop.f32.mrb[0].mxu0
        %v1621 = vadd.f32 0.0, %v1620
        %v1622 = vpop.f32.mrb[0].mxu0
        %v1623 = vpop.f32.mrb[0].mxu0
        %v1624 = vadd.f32 0.0, %v1623
        %v1625 = vpop.f32.mrb[0].mxu0
        %1626 = vmatprep.mubr.bf16.mxu0 %v1176
        %1627 = vmatmul.mubr.bf16.gmra.mrb[0].mxu0 %v881
        %v1628 = vpop.f32.mrb[0].mxu0
        %v1629 = vadd.f32 0.0, %v1628
        %v1630 = vpop.f32.mrb[0].mxu0
        %v1631 = vpop.f32.mrb[0].mxu0
        %v1632 = vadd.f32 0.0, %v1631
        %v1633 = vpop.f32.mrb[0].mxu0
        %1634 = vmatprep.mubr.bf16.mxu0 %v1179
        %1635 = vmatmul.mubr.bf16.gmra.mrb[0].mxu0 %v883
        %v1636 = vpop.f32.mrb[0].mxu0
        %v1637 = vadd.f32 0.0, %v1636
        %v1638 = vpop.f32.mrb[0].mxu0
        %v1639 = vpop.f32.mrb[0].mxu0
        %v1640 = vadd.f32 0.0, %v1639
        %v1641 = vpop.f32.mrb[0].mxu0
        %1642 = vmatprep.mubr.bf16.mxu0 %v1182
        %1643 = vmatmul.mubr.bf16.gmra.mrb[0].mxu0 %v885
        %v1644 = vpop.f32.mrb[0].mxu0
        %v1645 = vadd.f32 0.0, %v1644
        %v1646 = vpop.f32.mrb[0].mxu0
        %v1647 = vpop.f32.mrb[0].mxu0
        %v1648 = vadd.f32 0.0, %v1647
        %v1649 = vpop.f32.mrb[0].mxu0
        %1650 = vmatprep.mubr.bf16.mxu0 %v1185
        %1651 = vmatmul.mubr.bf16.gmra.mrb[0].mxu0 %v887
        %v1652 = vpop.f32.mrb[0].mxu0
        %v1653 = vadd.f32 0.0, %v1652
        %v1654 = vpop.f32.mrb[0].mxu0
        %v1655 = vpop.f32.mrb[0].mxu0
        %v1656 = vadd.f32 0.0, %v1655
        %v1657 = vpop.f32.mrb[0].mxu0
        %1658 = vmatprep.mubr.bf16.mxu0 %v1188
        %1659 = vmatmul.mubr.bf16.gmra.mrb[0].mxu0 %v889
        %v1660 = vpop.f32.mrb[0].mxu0
        %v1661 = vadd.f32 0.0, %v1660
        %v1662 = vpop.f32.mrb[0].mxu0
        %v1663 = vpop.f32.mrb[0].mxu0
        %v1664 = vadd.f32 0.0, %v1663
        %v1665 = vpop.f32.mrb[0].mxu0
        %1666 = vmatprep.mubr.bf16.mxu0 %v1191
        %1667 = vmatmul.mubr.bf16.gmra.mrb[0].mxu0 %v891
        %v1668 = vpop.f32.mrb[0].mxu0
        %v1669 = vadd.f32 0.0, %v1668
        %v1670 = vpop.f32.mrb[0].mxu0
        %v1671 = vpop.f32.mrb[0].mxu0
        %v1672 = vadd.f32 0.0, %v1671
        %v1673 = vpop.f32.mrb[0].mxu0
        %1674 = vmatprep.mubr.bf16.mxu0 %v1194
        %1675 = vmatmul.mubr.bf16.gmra.mrb[0].mxu0 %v893
        %v1676 = vpop.f32.mrb[0].mxu0
        %v1677 = vadd.f32 0.0, %v1676
        %v1678 = vpop.f32.mrb[0].mxu0
        %v1679 = vpop.f32.mrb[0].mxu0
        %v1680 = vadd.f32 0.0, %v1679
        %v1681 = vpop.f32.mrb[0].mxu0
        %1682 = vmatprep.mubr.bf16.mxu0 %v1197
        %1683 = vmatmul.mubr.bf16.gmra.mrb[0].mxu0 %v895
        %v1684 = vpop.f32.mrb[0].mxu0
        %v1685 = vadd.f32 0.0, %v1684
        %v1686 = vpop.f32.mrb[0].mxu0
        %v1687 = vpop.f32.mrb[0].mxu0
        %v1688 = vadd.f32 0.0, %v1687
        %v1689 = vpop.f32.mrb[0].mxu0
        %1690 = vmatprep.mubr.bf16.mxu0 %v1200
        %1691 = vmatmul.mubr.bf16.gmra.mrb[0].mxu0 %v897
        %v1692 = vpop.f32.mrb[0].mxu0
        %v1693 = vadd.f32 0.0, %v1692
        %v1694 = vpop.f32.mrb[0].mxu0
        %v1695 = vpop.f32.mrb[0].mxu0
        %v1696 = vadd.f32 0.0, %v1695
        %v1697 = vpop.f32.mrb[0].mxu0
        %1698 = vmatprep.mubr.bf16.mxu0 %v1203
        %1699 = vmatmul.mubr.bf16.gmra.mrb[0].mxu0 %v899
        %v1700 = vpop.f32.mrb[0].mxu0
        %v1701 = vadd.f32 0.0, %v1700
        %v1702 = vpop.f32.mrb[0].mxu0
        %v1703 = vpop.f32.mrb[0].mxu0
        %v1704 = vadd.f32 0.0, %v1703
        %v1705 = vpop.f32.mrb[0].mxu0
        %1706 = vmatprep.mubr.bf16.mxu0 %v1206
        %1707 = vmatmul.mubr.bf16.gmra.mrb[0].mxu0 %v901
        %v1708 = vpop.f32.mrb[0].mxu0
        %v1709 = vadd.f32 0.0, %v1708
        %v1710 = vpop.f32.mrb[0].mxu0
        %v1711 = vpop.f32.mrb[0].mxu0
        %v1712 = vadd.f32 0.0, %v1711
        %v1713 = vpop.f32.mrb[0].mxu0
        %1714 = vmatprep.mubr.bf16.mxu0 %v1209
        %1715 = vmatmul.mubr.bf16.gmra.mrb[0].mxu0 %v903
        %v1716 = vpop.f32.mrb[0].mxu0
        %v1717 = vadd.f32 0.0, %v1716
        %v1718 = vpop.f32.mrb[0].mxu0
        %v1719 = vpop.f32.mrb[0].mxu0
        %v1720 = vadd.f32 0.0, %v1719
        %v1721 = vpop.f32.mrb[0].mxu0
        %1722 = vmatprep.mubr.bf16.mxu0 %v1212
        %1723 = vmatmul.mubr.bf16.gmra.mrb[0].mxu0 %v905
        %v1724 = vpop.f32.mrb[0].mxu0
        %v1725 = vadd.f32 0.0, %v1724
        %v1726 = vpop.f32.mrb[0].mxu0
        %v1727 = vpop.f32.mrb[0].mxu0
        %v1728 = vadd.f32 0.0, %v1727
        %v1729 = vpop.f32.mrb[0].mxu0
        %1730 = vmatprep.mubr.bf16.mxu0 %v1215
        %1731 = vmatmul.mubr.bf16.gmra.mrb[0].mxu0 %v907
        %v1732 = vpop.f32.mrb[0].mxu0
        %v1733 = vadd.f32 0.0, %v1732
        %v1734 = vpop.f32.mrb[0].mxu0
        %v1735 = vpop.f32.mrb[0].mxu0
        %v1736 = vadd.f32 0.0, %v1735
        %v1737 = vpop.f32.mrb[0].mxu0
        %1738 = vmatprep.mubr.bf16.mxu0 %v1218
        %1739 = vmatmul.mubr.bf16.gmra.mrb[0].mxu0 %v909
        %v1740 = vpop.f32.mrb[0].mxu0
        %v1741 = vadd.f32 0.0, %v1740
        %v1742 = vpop.f32.mrb[0].mxu0
        %v1743 = vpop.f32.mrb[0].mxu0
        %v1744 = vadd.f32 0.0, %v1743
        %v1745 = vpop.f32.mrb[0].mxu0
        %1746 = vmatprep.mubr.bf16.mxu0 %v1221
        %1747 = vmatmul.mubr.bf16.gmra.mrb[0].mxu0 %v911
        %v1748 = vpop.f32.mrb[0].mxu0
        %v1749 = vadd.f32 0.0, %v1748
        %v1750 = vpop.f32.mrb[0].mxu0
        %v1751 = vpop.f32.mrb[0].mxu0
        %v1752 = vadd.f32 0.0, %v1751
        %v1753 = vpop.f32.mrb[0].mxu0
        %1754 = vmatprep.mubr.bf16.mxu0 %v1224
        %1755 = vmatmul.mubr.bf16.gmra.mrb[0].mxu0 %v913
        %v1756 = vpop.f32.mrb[0].mxu0
        %v1757 = vadd.f32 0.0, %v1756
        %v1758 = vpop.f32.mrb[0].mxu0
        %v1759 = vpop.f32.mrb[0].mxu0
        %v1760 = vadd.f32 0.0, %v1759
        %v1761 = vpop.f32.mrb[0].mxu0
        %1762 = vmatprep.mubr.bf16.mxu0 %v1227
        %1763 = vmatmul.mubr.bf16.gmra.mrb[0].mxu0 %v915
        %v1764 = vpop.f32.mrb[0].mxu0
        %v1765 = vadd.f32 0.0, %v1764
        %v1766 = vpop.f32.mrb[0].mxu0
        %v1767 = vpop.f32.mrb[0].mxu0
        %v1768 = vadd.f32 0.0, %v1767
        %v1769 = vpop.f32.mrb[0].mxu0
        %1770 = vmatprep.mubr.bf16.mxu0 %v1230
        %1771 = vmatmul.mubr.bf16.gmra.mrb[0].mxu0 %v917
        %v1772 = vpop.f32.mrb[0].mxu0
        %v1773 = vadd.f32 0.0, %v1772
        %v1774 = vpop.f32.mrb[0].mxu0
        %v1775 = vpop.f32.mrb[0].mxu0
        %v1776 = vadd.f32 0.0, %v1775
        %v1777 = vpop.f32.mrb[0].mxu0
        %1778 = vmatprep.mubr.bf16.mxu0 %v1233
        %1779 = vmatmul.mubr.bf16.gmra.mrb[0].mxu0 %v919
        %v1780 = vpop.f32.mrb[0].mxu0
        %v1781 = vadd.f32 0.0, %v1780
        %v1782 = vpop.f32.mrb[0].mxu0
        %v1783 = vpop.f32.mrb[0].mxu0
        %v1784 = vadd.f32 0.0, %v1783
        %v1785 = vpop.f32.mrb[0].mxu0
        %1786 = vdwg.mxu0
        %v1787 = vld [vmem:[%s256] sm:$0x1]
        %v1789 = vlaneseq
        %v1790 = vshrl.u32 %v1789, 7
        %v1791 = vsub.s32 0, %v1790
        %v1792 = vrot.slane %v1787, %v1791
        %v1794 = vmul.f32 %v1277, %v1792
        %v1795 = vmul.f32 %v1280, %v1792
        %v1796 = vmul.f32 %v1285, %v1792
        %v1797 = vmul.f32 %v1288, %v1792
        %v1798 = vmul.f32 %v1293, %v1792
        %v1799 = vmul.f32 %v1296, %v1792
        %v1800 = vmul.f32 %v1301, %v1792
        %v1801 = vmul.f32 %v1304, %v1792
        %v1802 = vmul.f32 %v1309, %v1792
        %v1803 = vmul.f32 %v1312, %v1792
        %v1804 = vmul.f32 %v1317, %v1792
        %v1805 = vmul.f32 %v1320, %v1792
        %v1806 = vmul.f32 %v1325, %v1792
        %v1807 = vmul.f32 %v1328, %v1792
        %v1808 = vmul.f32 %v1333, %v1792
        %v1809 = vmul.f32 %v1336, %v1792
        %v1810 = vmul.f32 %v1341, %v1792
        %v1811 = vmul.f32 %v1344, %v1792
        %v1812 = vmul.f32 %v1349, %v1792
        %v1813 = vmul.f32 %v1352, %v1792
        %v1814 = vmul.f32 %v1357, %v1792
        %v1815 = vmul.f32 %v1360, %v1792
        %v1816 = vmul.f32 %v1365, %v1792
        %v1817 = vmul.f32 %v1368, %v1792
        %v1818 = vmul.f32 %v1373, %v1792
        %v1819 = vmul.f32 %v1376, %v1792
        %v1820 = vmul.f32 %v1381, %v1792
        %v1821 = vmul.f32 %v1384, %v1792
        %v1822 = vmul.f32 %v1389, %v1792
        %v1823 = vmul.f32 %v1392, %v1792
        %v1824 = vmul.f32 %v1397, %v1792
        %v1825 = vmul.f32 %v1400, %v1792
        %v1826 = vmul.f32 %v1405, %v1792
        %v1827 = vmul.f32 %v1408, %v1792
        %v1828 = vmul.f32 %v1413, %v1792
        %v1829 = vmul.f32 %v1416, %v1792
        %v1830 = vmul.f32 %v1421, %v1792
        %v1831 = vmul.f32 %v1424, %v1792
        %v1832 = vmul.f32 %v1429, %v1792
        %v1833 = vmul.f32 %v1432, %v1792
        %v1834 = vmul.f32 %v1437, %v1792
        %v1835 = vmul.f32 %v1440, %v1792
        %v1836 = vmul.f32 %v1445, %v1792
        %v1837 = vmul.f32 %v1448, %v1792
        %v1838 = vmul.f32 %v1453, %v1792
        %v1839 = vmul.f32 %v1456, %v1792
        %v1840 = vmul.f32 %v1461, %v1792
        %v1841 = vmul.f32 %v1464, %v1792
        %v1842 = vmul.f32 %v1469, %v1792
        %v1843 = vmul.f32 %v1472, %v1792
        %v1844 = vmul.f32 %v1477, %v1792
        %v1845 = vmul.f32 %v1480, %v1792
        %v1846 = vmul.f32 %v1485, %v1792
        %v1847 = vmul.f32 %v1488, %v1792
        %v1848 = vmul.f32 %v1493, %v1792
        %v1849 = vmul.f32 %v1496, %v1792
        %v1850 = vmul.f32 %v1501, %v1792
        %v1851 = vmul.f32 %v1504, %v1792
        %v1852 = vmul.f32 %v1509, %v1792
        %v1853 = vmul.f32 %v1512, %v1792
        %v1854 = vmul.f32 %v1517, %v1792
        %v1855 = vmul.f32 %v1520, %v1792
        %v1856 = vmul.f32 %v1525, %v1792
        %v1857 = vmul.f32 %v1528, %v1792
        %v1858 = vmul.f32 %v1533, %v1792
        %v1859 = vmul.f32 %v1536, %v1792
        %v1860 = vmul.f32 %v1541, %v1792
        %v1861 = vmul.f32 %v1544, %v1792
        %v1862 = vmul.f32 %v1549, %v1792
        %v1863 = vmul.f32 %v1552, %v1792
        %v1864 = vmul.f32 %v1557, %v1792
        %v1865 = vmul.f32 %v1560, %v1792
        %v1866 = vmul.f32 %v1565, %v1792
        %v1867 = vmul.f32 %v1568, %v1792
        %v1868 = vmul.f32 %v1573, %v1792
        %v1869 = vmul.f32 %v1576, %v1792
        %v1870 = vmul.f32 %v1581, %v1792
        %v1871 = vmul.f32 %v1584, %v1792
        %v1872 = vmul.f32 %v1589, %v1792
        %v1873 = vmul.f32 %v1592, %v1792
        %v1874 = vmul.f32 %v1597, %v1792
        %v1875 = vmul.f32 %v1600, %v1792
        %v1876 = vmul.f32 %v1605, %v1792
        %v1877 = vmul.f32 %v1608, %v1792
        %v1878 = vmul.f32 %v1613, %v1792
        %v1879 = vmul.f32 %v1616, %v1792
        %v1880 = vmul.f32 %v1621, %v1792
        %v1881 = vmul.f32 %v1624, %v1792
        %v1882 = vmul.f32 %v1629, %v1792
        %v1883 = vmul.f32 %v1632, %v1792
        %v1884 = vmul.f32 %v1637, %v1792
        %v1885 = vmul.f32 %v1640, %v1792
        %v1886 = vmul.f32 %v1645, %v1792
        %v1887 = vmul.f32 %v1648, %v1792
        %v1888 = vmul.f32 %v1653, %v1792
        %v1889 = vmul.f32 %v1656, %v1792
        %v1890 = vmul.f32 %v1661, %v1792
        %v1891 = vmul.f32 %v1664, %v1792
        %v1892 = vmul.f32 %v1669, %v1792
        %v1893 = vmul.f32 %v1672, %v1792
        %v1894 = vmul.f32 %v1677, %v1792
        %v1895 = vmul.f32 %v1680, %v1792
        %v1896 = vmul.f32 %v1685, %v1792
        %v1897 = vmul.f32 %v1688, %v1792
        %v1898 = vmul.f32 %v1693, %v1792
        %v1899 = vmul.f32 %v1696, %v1792
        %v1900 = vmul.f32 %v1701, %v1792
        %v1901 = vmul.f32 %v1704, %v1792
        %v1902 = vmul.f32 %v1709, %v1792
        %v1903 = vmul.f32 %v1712, %v1792
        %v1904 = vmul.f32 %v1717, %v1792
        %v1905 = vmul.f32 %v1720, %v1792
        %v1906 = vmul.f32 %v1725, %v1792
        %v1907 = vmul.f32 %v1728, %v1792
        %v1908 = vmul.f32 %v1733, %v1792
        %v1909 = vmul.f32 %v1736, %v1792
        %v1910 = vmul.f32 %v1741, %v1792
        %v1911 = vmul.f32 %v1744, %v1792
        %v1912 = vmul.f32 %v1749, %v1792
        %v1913 = vmul.f32 %v1752, %v1792
        %v1914 = vmul.f32 %v1757, %v1792
        %v1915 = vmul.f32 %v1760, %v1792
        %v1916 = vmul.f32 %v1765, %v1792
        %v1917 = vmul.f32 %v1768, %v1792
        %v1918 = vmul.f32 %v1773, %v1792
        %v1919 = vmul.f32 %v1776, %v1792
        %v1920 = vmul.f32 %v1781, %v1792
        %v1921 = vmul.f32 %v1784, %v1792
        %v1922 = vld [vmem:[%s259] sm:$0x1]
        %v1924 = vlaneseq
        %v1925 = vshrl.u32 %v1924, 7
        %v1926 = vsub.s32 0, %v1925
        %v1927 = vrot.slane %v1922, %v1926
        %v1929 = vadd.f32 %v1794, %v1927
        %v1930 = vadd.f32 %v1795, %v1927
        %v1931 = vadd.f32 %v1796, %v1927
        %v1932 = vadd.f32 %v1797, %v1927
        %v1933 = vadd.f32 %v1798, %v1927
        %v1934 = vadd.f32 %v1799, %v1927
        %v1935 = vadd.f32 %v1800, %v1927
        %v1936 = vadd.f32 %v1801, %v1927
        %v1937 = vadd.f32 %v1802, %v1927
        %v1938 = vadd.f32 %v1803, %v1927
        %v1939 = vadd.f32 %v1804, %v1927
        %v1940 = vadd.f32 %v1805, %v1927
        %v1941 = vadd.f32 %v1806, %v1927
        %v1942 = vadd.f32 %v1807, %v1927
        %v1943 = vadd.f32 %v1808, %v1927
        %v1944 = vadd.f32 %v1809, %v1927
        %v1945 = vadd.f32 %v1810, %v1927
        %v1946 = vadd.f32 %v1811, %v1927
        %v1947 = vadd.f32 %v1812, %v1927
        %v1948 = vadd.f32 %v1813, %v1927
        %v1949 = vadd.f32 %v1814, %v1927
        %v1950 = vadd.f32 %v1815, %v1927
        %v1951 = vadd.f32 %v1816, %v1927
        %v1952 = vadd.f32 %v1817, %v1927
        %v1953 = vadd.f32 %v1818, %v1927
        %v1954 = vadd.f32 %v1819, %v1927
        %v1955 = vadd.f32 %v1820, %v1927
        %v1956 = vadd.f32 %v1821, %v1927
        %v1957 = vadd.f32 %v1822, %v1927
        %v1958 = vadd.f32 %v1823, %v1927
        %v1959 = vadd.f32 %v1824, %v1927
        %v1960 = vadd.f32 %v1825, %v1927
        %v1961 = vadd.f32 %v1826, %v1927
        %v1962 = vadd.f32 %v1827, %v1927
        %v1963 = vadd.f32 %v1828, %v1927
        %v1964 = vadd.f32 %v1829, %v1927
        %v1965 = vadd.f32 %v1830, %v1927
        %v1966 = vadd.f32 %v1831, %v1927
        %v1967 = vadd.f32 %v1832, %v1927
        %v1968 = vadd.f32 %v1833, %v1927
        %v1969 = vadd.f32 %v1834, %v1927
        %v1970 = vadd.f32 %v1835, %v1927
        %v1971 = vadd.f32 %v1836, %v1927
        %v1972 = vadd.f32 %v1837, %v1927
        %v1973 = vadd.f32 %v1838, %v1927
        %v1974 = vadd.f32 %v1839, %v1927
        %v1975 = vadd.f32 %v1840, %v1927
        %v1976 = vadd.f32 %v1841, %v1927
        %v1977 = vadd.f32 %v1842, %v1927
        %v1978 = vadd.f32 %v1843, %v1927
        %v1979 = vadd.f32 %v1844, %v1927
        %v1980 = vadd.f32 %v1845, %v1927
        %v1981 = vadd.f32 %v1846, %v1927
        %v1982 = vadd.f32 %v1847, %v1927
        %v1983 = vadd.f32 %v1848, %v1927
        %v1984 = vadd.f32 %v1849, %v1927
        %v1985 = vadd.f32 %v1850, %v1927
        %v1986 = vadd.f32 %v1851, %v1927
        %v1987 = vadd.f32 %v1852, %v1927
        %v1988 = vadd.f32 %v1853, %v1927
        %v1989 = vadd.f32 %v1854, %v1927
        %v1990 = vadd.f32 %v1855, %v1927
        %v1991 = vadd.f32 %v1856, %v1927
        %v1992 = vadd.f32 %v1857, %v1927
        %v1993 = vadd.f32 %v1858, %v1927
        %v1994 = vadd.f32 %v1859, %v1927
        %v1995 = vadd.f32 %v1860, %v1927
        %v1996 = vadd.f32 %v1861, %v1927
        %v1997 = vadd.f32 %v1862, %v1927
        %v1998 = vadd.f32 %v1863, %v1927
        %v1999 = vadd.f32 %v1864, %v1927
        %v2000 = vadd.f32 %v1865, %v1927
        %v2001 = vadd.f32 %v1866, %v1927
        %v2002 = vadd.f32 %v1867, %v1927
        %v2003 = vadd.f32 %v1868, %v1927
        %v2004 = vadd.f32 %v1869, %v1927
        %v2005 = vadd.f32 %v1870, %v1927
        %v2006 = vadd.f32 %v1871, %v1927
        %v2007 = vadd.f32 %v1872, %v1927
        %v2008 = vadd.f32 %v1873, %v1927
        %v2009 = vadd.f32 %v1874, %v1927
        %v2010 = vadd.f32 %v1875, %v1927
        %v2011 = vadd.f32 %v1876, %v1927
        %v2012 = vadd.f32 %v1877, %v1927
        %v2013 = vadd.f32 %v1878, %v1927
        %v2014 = vadd.f32 %v1879, %v1927
        %v2015 = vadd.f32 %v1880, %v1927
        %v2016 = vadd.f32 %v1881, %v1927
        %v2017 = vadd.f32 %v1882, %v1927
        %v2018 = vadd.f32 %v1883, %v1927
        %v2019 = vadd.f32 %v1884, %v1927
        %v2020 = vadd.f32 %v1885, %v1927
        %v2021 = vadd.f32 %v1886, %v1927
        %v2022 = vadd.f32 %v1887, %v1927
        %v2023 = vadd.f32 %v1888, %v1927
        %v2024 = vadd.f32 %v1889, %v1927
        %v2025 = vadd.f32 %v1890, %v1927
        %v2026 = vadd.f32 %v1891, %v1927
        %v2027 = vadd.f32 %v1892, %v1927
        %v2028 = vadd.f32 %v1893, %v1927
        %v2029 = vadd.f32 %v1894, %v1927
        %v2030 = vadd.f32 %v1895, %v1927
        %v2031 = vadd.f32 %v1896, %v1927
        %v2032 = vadd.f32 %v1897, %v1927
        %v2033 = vadd.f32 %v1898, %v1927
        %v2034 = vadd.f32 %v1899, %v1927
        %v2035 = vadd.f32 %v1900, %v1927
        %v2036 = vadd.f32 %v1901, %v1927
        %v2037 = vadd.f32 %v1902, %v1927
        %v2038 = vadd.f32 %v1903, %v1927
        %v2039 = vadd.f32 %v1904, %v1927
        %v2040 = vadd.f32 %v1905, %v1927
        %v2041 = vadd.f32 %v1906, %v1927
        %v2042 = vadd.f32 %v1907, %v1927
        %v2043 = vadd.f32 %v1908, %v1927
        %v2044 = vadd.f32 %v1909, %v1927
        %v2045 = vadd.f32 %v1910, %v1927
        %v2046 = vadd.f32 %v1911, %v1927
        %v2047 = vadd.f32 %v1912, %v1927
        %v2048 = vadd.f32 %v1913, %v1927
        %v2049 = vadd.f32 %v1914, %v1927
        %v2050 = vadd.f32 %v1915, %v1927
        %v2051 = vadd.f32 %v1916, %v1927
        %v2052 = vadd.f32 %v1917, %v1927
        %v2053 = vadd.f32 %v1918, %v1927
        %v2054 = vadd.f32 %v1919, %v1927
        %v2055 = vadd.f32 %v1920, %v1927
        %v2056 = vadd.f32 %v1921, %v1927
        %v2057 = vmax.f32 %v1929, 0.0
        %v2058 = vmax.f32 %v1930, 0.0
        %v2059 = vmax.f32 %v1931, 0.0
        %v2060 = vmax.f32 %v1932, 0.0
        %v2061 = vmax.f32 %v1933, 0.0
        %v2062 = vmax.f32 %v1934, 0.0
        %v2063 = vmax.f32 %v1935, 0.0
        %v2064 = vmax.f32 %v1936, 0.0
        %v2065 = vmax.f32 %v1937, 0.0
        %v2066 = vmax.f32 %v1938, 0.0
        %v2067 = vmax.f32 %v1939, 0.0
        %v2068 = vmax.f32 %v1940, 0.0
        %v2069 = vmax.f32 %v1941, 0.0
        %v2070 = vmax.f32 %v1942, 0.0
        %v2071 = vmax.f32 %v1943, 0.0
        %v2072 = vmax.f32 %v1944, 0.0
        %v2073 = vmax.f32 %v1945, 0.0
        %v2074 = vmax.f32 %v1946, 0.0
        %v2075 = vmax.f32 %v1947, 0.0
        %v2076 = vmax.f32 %v1948, 0.0
        %v2077 = vmax.f32 %v1949, 0.0
        %v2078 = vmax.f32 %v1950, 0.0
        %v2079 = vmax.f32 %v1951, 0.0
        %v2080 = vmax.f32 %v1952, 0.0
        %v2081 = vmax.f32 %v1953, 0.0
        %v2082 = vmax.f32 %v1954, 0.0
        %v2083 = vmax.f32 %v1955, 0.0
        %v2084 = vmax.f32 %v1956, 0.0
        %v2085 = vmax.f32 %v1957, 0.0
        %v2086 = vmax.f32 %v1958, 0.0
        %v2087 = vmax.f32 %v1959, 0.0
        %v2088 = vmax.f32 %v1960, 0.0
        %v2089 = vmax.f32 %v1961, 0.0
        %v2090 = vmax.f32 %v1962, 0.0
        %v2091 = vmax.f32 %v1963, 0.0
        %v2092 = vmax.f32 %v1964, 0.0
        %v2093 = vmax.f32 %v1965, 0.0
        %v2094 = vmax.f32 %v1966, 0.0
        %v2095 = vmax.f32 %v1967, 0.0
        %v2096 = vmax.f32 %v1968, 0.0
        %v2097 = vmax.f32 %v1969, 0.0
        %v2098 = vmax.f32 %v1970, 0.0
        %v2099 = vmax.f32 %v1971, 0.0
        %v2100 = vmax.f32 %v1972, 0.0
        %v2101 = vmax.f32 %v1973, 0.0
        %v2102 = vmax.f32 %v1974, 0.0
        %v2103 = vmax.f32 %v1975, 0.0
        %v2104 = vmax.f32 %v1976, 0.0
        %v2105 = vmax.f32 %v1977, 0.0
        %v2106 = vmax.f32 %v1978, 0.0
        %v2107 = vmax.f32 %v1979, 0.0
        %v2108 = vmax.f32 %v1980, 0.0
        %v2109 = vmax.f32 %v1981, 0.0
        %v2110 = vmax.f32 %v1982, 0.0
        %v2111 = vmax.f32 %v1983, 0.0
        %v2112 = vmax.f32 %v1984, 0.0
        %v2113 = vmax.f32 %v1985, 0.0
        %v2114 = vmax.f32 %v1986, 0.0
        %v2115 = vmax.f32 %v1987, 0.0
        %v2116 = vmax.f32 %v1988, 0.0
        %v2117 = vmax.f32 %v1989, 0.0
        %v2118 = vmax.f32 %v1990, 0.0
        %v2119 = vmax.f32 %v1991, 0.0
        %v2120 = vmax.f32 %v1992, 0.0
        %v2121 = vmax.f32 %v1993, 0.0
        %v2122 = vmax.f32 %v1994, 0.0
        %v2123 = vmax.f32 %v1995, 0.0
        %v2124 = vmax.f32 %v1996, 0.0
        %v2125 = vmax.f32 %v1997, 0.0
        %v2126 = vmax.f32 %v1998, 0.0
        %v2127 = vmax.f32 %v1999, 0.0
        %v2128 = vmax.f32 %v2000, 0.0
        %v2129 = vmax.f32 %v2001, 0.0
        %v2130 = vmax.f32 %v2002, 0.0
        %v2131 = vmax.f32 %v2003, 0.0
        %v2132 = vmax.f32 %v2004, 0.0
        %v2133 = vmax.f32 %v2005, 0.0
        %v2134 = vmax.f32 %v2006, 0.0
        %v2135 = vmax.f32 %v2007, 0.0
        %v2136 = vmax.f32 %v2008, 0.0
        %v2137 = vmax.f32 %v2009, 0.0
        %v2138 = vmax.f32 %v2010, 0.0
        %v2139 = vmax.f32 %v2011, 0.0
        %v2140 = vmax.f32 %v2012, 0.0
        %v2141 = vmax.f32 %v2013, 0.0
        %v2142 = vmax.f32 %v2014, 0.0
        %v2143 = vmax.f32 %v2015, 0.0
        %v2144 = vmax.f32 %v2016, 0.0
        %v2145 = vmax.f32 %v2017, 0.0
        %v2146 = vmax.f32 %v2018, 0.0
        %v2147 = vmax.f32 %v2019, 0.0
        %v2148 = vmax.f32 %v2020, 0.0
        %v2149 = vmax.f32 %v2021, 0.0
        %v2150 = vmax.f32 %v2022, 0.0
        %v2151 = vmax.f32 %v2023, 0.0
        %v2152 = vmax.f32 %v2024, 0.0
        %v2153 = vmax.f32 %v2025, 0.0
        %v2154 = vmax.f32 %v2026, 0.0
        %v2155 = vmax.f32 %v2027, 0.0
        %v2156 = vmax.f32 %v2028, 0.0
        %v2157 = vmax.f32 %v2029, 0.0
        %v2158 = vmax.f32 %v2030, 0.0
        %v2159 = vmax.f32 %v2031, 0.0
        %v2160 = vmax.f32 %v2032, 0.0
        %v2161 = vmax.f32 %v2033, 0.0
        %v2162 = vmax.f32 %v2034, 0.0
        %v2163 = vmax.f32 %v2035, 0.0
        %v2164 = vmax.f32 %v2036, 0.0
        %v2165 = vmax.f32 %v2037, 0.0
        %v2166 = vmax.f32 %v2038, 0.0
        %v2167 = vmax.f32 %v2039, 0.0
        %v2168 = vmax.f32 %v2040, 0.0
        %v2169 = vmax.f32 %v2041, 0.0
        %v2170 = vmax.f32 %v2042, 0.0
        %v2171 = vmax.f32 %v2043, 0.0
        %v2172 = vmax.f32 %v2044, 0.0
        %v2173 = vmax.f32 %v2045, 0.0
        %v2174 = vmax.f32 %v2046, 0.0
        %v2175 = vmax.f32 %v2047, 0.0
        %v2176 = vmax.f32 %v2048, 0.0
        %v2177 = vmax.f32 %v2049, 0.0
        %v2178 = vmax.f32 %v2050, 0.0
        %v2179 = vmax.f32 %v2051, 0.0
        %v2180 = vmax.f32 %v2052, 0.0
        %v2181 = vmax.f32 %v2053, 0.0
        %v2182 = vmax.f32 %v2054, 0.0
        %v2183 = vmax.f32 %v2055, 0.0
        %v2184 = vmax.f32 %v2056, 0.0
        %v2185 = vpack.c.bf16 %v2058, %v2057
        %v2186 = vpack.c.bf16 %v2060, %v2059
        %v2187 = vpack.c.bf16 %v2062, %v2061
        %v2188 = vpack.c.bf16 %v2064, %v2063
        %v2189 = vpack.c.bf16 %v2066, %v2065
        %v2190 = vpack.c.bf16 %v2068, %v2067
        %v2191 = vpack.c.bf16 %v2070, %v2069
        %v2192 = vpack.c.bf16 %v2072, %v2071
        %v2193 = vpack.c.bf16 %v2074, %v2073
        %v2194 = vpack.c.bf16 %v2076, %v2075
        %v2195 = vpack.c.bf16 %v2078, %v2077
        %v2196 = vpack.c.bf16 %v2080, %v2079
        %v2197 = vpack.c.bf16 %v2082, %v2081
        %v2198 = vpack.c.bf16 %v2084, %v2083
        %v2199 = vpack.c.bf16 %v2086, %v2085
        %v2200 = vpack.c.bf16 %v2088, %v2087
        %v2201 = vpack.c.bf16 %v2090, %v2089
        %v2202 = vpack.c.bf16 %v2092, %v2091
        %v2203 = vpack.c.bf16 %v2094, %v2093
        %v2204 = vpack.c.bf16 %v2096, %v2095
        %v2205 = vpack.c.bf16 %v2098, %v2097
        %v2206 = vpack.c.bf16 %v2100, %v2099
        %v2207 = vpack.c.bf16 %v2102, %v2101
        %v2208 = vpack.c.bf16 %v2104, %v2103
        %v2209 = vpack.c.bf16 %v2106, %v2105
        %v2210 = vpack.c.bf16 %v2108, %v2107
        %v2211 = vpack.c.bf16 %v2110, %v2109
        %v2212 = vpack.c.bf16 %v2112, %v2111
        %v2213 = vpack.c.bf16 %v2114, %v2113
        %v2214 = vpack.c.bf16 %v2116, %v2115
        %v2215 = vpack.c.bf16 %v2118, %v2117
        %v2216 = vpack.c.bf16 %v2120, %v2119
        %v2217 = vpack.c.bf16 %v2122, %v2121
        %v2218 = vpack.c.bf16 %v2124, %v2123
        %v2219 = vpack.c.bf16 %v2126, %v2125
        %v2220 = vpack.c.bf16 %v2128, %v2127
        %v2221 = vpack.c.bf16 %v2130, %v2129
        %v2222 = vpack.c.bf16 %v2132, %v2131
        %v2223 = vpack.c.bf16 %v2134, %v2133
        %v2224 = vpack.c.bf16 %v2136, %v2135
        %v2225 = vpack.c.bf16 %v2138, %v2137
        %v2226 = vpack.c.bf16 %v2140, %v2139
        %v2227 = vpack.c.bf16 %v2142, %v2141
        %v2228 = vpack.c.bf16 %v2144, %v2143
        %v2229 = vpack.c.bf16 %v2146, %v2145
        %v2230 = vpack.c.bf16 %v2148, %v2147
        %v2231 = vpack.c.bf16 %v2150, %v2149
        %v2232 = vpack.c.bf16 %v2152, %v2151
        %v2233 = vpack.c.bf16 %v2154, %v2153
        %v2234 = vpack.c.bf16 %v2156, %v2155
        %v2235 = vpack.c.bf16 %v2158, %v2157
        %v2236 = vpack.c.bf16 %v2160, %v2159
        %v2237 = vpack.c.bf16 %v2162, %v2161
        %v2238 = vpack.c.bf16 %v2164, %v2163
        %v2239 = vpack.c.bf16 %v2166, %v2165
        %v2240 = vpack.c.bf16 %v2168, %v2167
        %v2241 = vpack.c.bf16 %v2170, %v2169
        %v2242 = vpack.c.bf16 %v2172, %v2171
        %v2243 = vpack.c.bf16 %v2174, %v2173
        %v2244 = vpack.c.bf16 %v2176, %v2175
        %v2245 = vpack.c.bf16 %v2178, %v2177
        %v2246 = vpack.c.bf16 %v2180, %v2179
        %v2247 = vpack.c.bf16 %v2182, %v2181
        %v2248 = vpack.c.bf16 %v2184, %v2183
        %v2313 = vunpack.c.l.b16 %v2185
        %v2314 = vunpack.c.h.b16 %v2185
        %v2315 = vunpack.c.l.b16 %v2186
        %v2316 = vunpack.c.h.b16 %v2186
        %v2317 = vunpack.c.l.b16 %v2187
        %v2318 = vunpack.c.h.b16 %v2187
        %v2319 = vunpack.c.l.b16 %v2188
        %v2320 = vunpack.c.h.b16 %v2188
        %v2321 = vunpack.c.l.b16 %v2189
        %v2322 = vunpack.c.h.b16 %v2189
        %v2323 = vunpack.c.l.b16 %v2190
        %v2324 = vunpack.c.h.b16 %v2190
        %v2325 = vunpack.c.l.b16 %v2191
        %v2326 = vunpack.c.h.b16 %v2191
        %v2327 = vunpack.c.l.b16 %v2192
        %v2328 = vunpack.c.h.b16 %v2192
        %v2329 = vunpack.c.l.b16 %v2193
        %v2330 = vunpack.c.h.b16 %v2193
        %v2331 = vunpack.c.l.b16 %v2194
        %v2332 = vunpack.c.h.b16 %v2194
        %v2333 = vunpack.c.l.b16 %v2195
        %v2334 = vunpack.c.h.b16 %v2195
        %v2335 = vunpack.c.l.b16 %v2196
        %v2336 = vunpack.c.h.b16 %v2196
        %v2337 = vunpack.c.l.b16 %v2197
        %v2338 = vunpack.c.h.b16 %v2197
        %v2339 = vunpack.c.l.b16 %v2198
        %v2340 = vunpack.c.h.b16 %v2198
        %v2341 = vunpack.c.l.b16 %v2199
        %v2342 = vunpack.c.h.b16 %v2199
        %v2343 = vunpack.c.l.b16 %v2200
        %v2344 = vunpack.c.h.b16 %v2200
        %v2345 = vunpack.c.l.b16 %v2201
        %v2346 = vunpack.c.h.b16 %v2201
        %v2347 = vunpack.c.l.b16 %v2202
        %v2348 = vunpack.c.h.b16 %v2202
        %v2349 = vunpack.c.l.b16 %v2203
        %v2350 = vunpack.c.h.b16 %v2203
        %v2351 = vunpack.c.l.b16 %v2204
        %v2352 = vunpack.c.h.b16 %v2204
        %v2353 = vunpack.c.l.b16 %v2205
        %v2354 = vunpack.c.h.b16 %v2205
        %v2355 = vunpack.c.l.b16 %v2206
        %v2356 = vunpack.c.h.b16 %v2206
        %v2357 = vunpack.c.l.b16 %v2207
        %v2358 = vunpack.c.h.b16 %v2207
        %v2359 = vunpack.c.l.b16 %v2208
        %v2360 = vunpack.c.h.b16 %v2208
        %v2361 = vunpack.c.l.b16 %v2209
        %v2362 = vunpack.c.h.b16 %v2209
        %v2363 = vunpack.c.l.b16 %v2210
        %v2364 = vunpack.c.h.b16 %v2210
        %v2365 = vunpack.c.l.b16 %v2211
        %v2366 = vunpack.c.h.b16 %v2211
        %v2367 = vunpack.c.l.b16 %v2212
        %v2368 = vunpack.c.h.b16 %v2212
        %v2369 = vunpack.c.l.b16 %v2213
        %v2370 = vunpack.c.h.b16 %v2213
        %v2371 = vunpack.c.l.b16 %v2214
        %v2372 = vunpack.c.h.b16 %v2214
        %v2373 = vunpack.c.l.b16 %v2215
        %v2374 = vunpack.c.h.b16 %v2215
        %v2375 = vunpack.c.l.b16 %v2216
        %v2376 = vunpack.c.h.b16 %v2216
        %v2377 = vunpack.c.l.b16 %v2217
        %v2378 = vunpack.c.h.b16 %v2217
        %v2379 = vunpack.c.l.b16 %v2218
        %v2380 = vunpack.c.h.b16 %v2218
        %v2381 = vunpack.c.l.b16 %v2219
        %v2382 = vunpack.c.h.b16 %v2219
        %v2383 = vunpack.c.l.b16 %v2220
        %v2384 = vunpack.c.h.b16 %v2220
        %v2385 = vunpack.c.l.b16 %v2221
        %v2386 = vunpack.c.h.b16 %v2221
        %v2387 = vunpack.c.l.b16 %v2222
        %v2388 = vunpack.c.h.b16 %v2222
        %v2389 = vunpack.c.l.b16 %v2223
        %v2390 = vunpack.c.h.b16 %v2223
        %v2391 = vunpack.c.l.b16 %v2224
        %v2392 = vunpack.c.h.b16 %v2224
        %v2393 = vunpack.c.l.b16 %v2225
        %v2394 = vunpack.c.h.b16 %v2225
        %v2395 = vunpack.c.l.b16 %v2226
        %v2396 = vunpack.c.h.b16 %v2226
        %v2397 = vunpack.c.l.b16 %v2227
        %v2398 = vunpack.c.h.b16 %v2227
        %v2399 = vunpack.c.l.b16 %v2228
        %v2400 = vunpack.c.h.b16 %v2228
        %v2401 = vunpack.c.l.b16 %v2229
        %v2402 = vunpack.c.h.b16 %v2229
        %v2403 = vunpack.c.l.b16 %v2230
        %v2404 = vunpack.c.h.b16 %v2230
        %v2405 = vunpack.c.l.b16 %v2231
        %v2406 = vunpack.c.h.b16 %v2231
        %v2407 = vunpack.c.l.b16 %v2232
        %v2408 = vunpack.c.h.b16 %v2232
        %v2409 = vunpack.c.l.b16 %v2233
        %v2410 = vunpack.c.h.b16 %v2233
        %v2411 = vunpack.c.l.b16 %v2234
        %v2412 = vunpack.c.h.b16 %v2234
        %v2413 = vunpack.c.l.b16 %v2235
        %v2414 = vunpack.c.h.b16 %v2235
        %v2415 = vunpack.c.l.b16 %v2236
        %v2416 = vunpack.c.h.b16 %v2236
        %v2417 = vunpack.c.l.b16 %v2237
        %v2418 = vunpack.c.h.b16 %v2237
        %v2419 = vunpack.c.l.b16 %v2238
        %v2420 = vunpack.c.h.b16 %v2238
        %v2421 = vunpack.c.l.b16 %v2239
        %v2422 = vunpack.c.h.b16 %v2239
        %v2423 = vunpack.c.l.b16 %v2240
        %v2424 = vunpack.c.h.b16 %v2240
        %v2425 = vunpack.c.l.b16 %v2241
        %v2426 = vunpack.c.h.b16 %v2241
        %v2427 = vunpack.c.l.b16 %v2242
        %v2428 = vunpack.c.h.b16 %v2242
        %v2429 = vunpack.c.l.b16 %v2243
        %v2430 = vunpack.c.h.b16 %v2243
        %v2431 = vunpack.c.l.b16 %v2244
        %v2432 = vunpack.c.h.b16 %v2244
        %v2433 = vunpack.c.l.b16 %v2245
        %v2434 = vunpack.c.h.b16 %v2245
        %v2435 = vunpack.c.l.b16 %v2246
        %v2436 = vunpack.c.h.b16 %v2246
        %v2437 = vunpack.c.l.b16 %v2247
        %v2438 = vunpack.c.h.b16 %v2247
        %v2439 = vunpack.c.l.b16 %v2248
        %v2440 = vunpack.c.h.b16 %v2248
        %v2441 = vpack.c.b16 %v2313, %v2313
        %v2442 = vpack.c.b16 %v2314, %v2314
        %v2443 = vpack.c.b16 %v2315, %v2315
        %v2444 = vpack.c.b16 %v2316, %v2316
        %v2445 = vpack.c.b16 %v2317, %v2317
        %v2446 = vpack.c.b16 %v2318, %v2318
        %v2447 = vpack.c.b16 %v2319, %v2319
        %v2448 = vpack.c.b16 %v2320, %v2320
        %v2449 = vpack.c.b16 %v2321, %v2321
        %v2450 = vpack.c.b16 %v2322, %v2322
        %v2451 = vpack.c.b16 %v2323, %v2323
        %v2452 = vpack.c.b16 %v2324, %v2324
        %v2453 = vpack.c.b16 %v2325, %v2325
        %v2454 = vpack.c.b16 %v2326, %v2326
        %v2455 = vpack.c.b16 %v2327, %v2327
        %v2456 = vpack.c.b16 %v2328, %v2328
        %v2457 = vpack.c.b16 %v2329, %v2329
        %v2458 = vpack.c.b16 %v2330, %v2330
        %v2459 = vpack.c.b16 %v2331, %v2331
        %v2460 = vpack.c.b16 %v2332, %v2332
        %v2461 = vpack.c.b16 %v2333, %v2333
        %v2462 = vpack.c.b16 %v2334, %v2334
        %v2463 = vpack.c.b16 %v2335, %v2335
        %v2464 = vpack.c.b16 %v2336, %v2336
        %v2465 = vpack.c.b16 %v2337, %v2337
        %v2466 = vpack.c.b16 %v2338, %v2338
        %v2467 = vpack.c.b16 %v2339, %v2339
        %v2468 = vpack.c.b16 %v2340, %v2340
        %v2469 = vpack.c.b16 %v2341, %v2341
        %v2470 = vpack.c.b16 %v2342, %v2342
        %v2471 = vpack.c.b16 %v2343, %v2343
        %v2472 = vpack.c.b16 %v2344, %v2344
        %v2473 = vpack.c.b16 %v2345, %v2345
        %v2474 = vpack.c.b16 %v2346, %v2346
        %v2475 = vpack.c.b16 %v2347, %v2347
        %v2476 = vpack.c.b16 %v2348, %v2348
        %v2477 = vpack.c.b16 %v2349, %v2349
        %v2478 = vpack.c.b16 %v2350, %v2350
        %v2479 = vpack.c.b16 %v2351, %v2351
        %v2480 = vpack.c.b16 %v2352, %v2352
        %v2481 = vpack.c.b16 %v2353, %v2353
        %v2482 = vpack.c.b16 %v2354, %v2354
        %v2483 = vpack.c.b16 %v2355, %v2355
        %v2484 = vpack.c.b16 %v2356, %v2356
        %v2485 = vpack.c.b16 %v2357, %v2357
        %v2486 = vpack.c.b16 %v2358, %v2358
        %v2487 = vpack.c.b16 %v2359, %v2359
        %v2488 = vpack.c.b16 %v2360, %v2360
        %v2489 = vpack.c.b16 %v2361, %v2361
        %v2490 = vpack.c.b16 %v2362, %v2362
        %v2491 = vpack.c.b16 %v2363, %v2363
        %v2492 = vpack.c.b16 %v2364, %v2364
        %v2493 = vpack.c.b16 %v2365, %v2365
        %v2494 = vpack.c.b16 %v2366, %v2366
        %v2495 = vpack.c.b16 %v2367, %v2367
        %v2496 = vpack.c.b16 %v2368, %v2368
        %v2497 = vpack.c.b16 %v2369, %v2369
        %v2498 = vpack.c.b16 %v2370, %v2370
        %v2499 = vpack.c.b16 %v2371, %v2371
        %v2500 = vpack.c.b16 %v2372, %v2372
        %v2501 = vpack.c.b16 %v2373, %v2373
        %v2502 = vpack.c.b16 %v2374, %v2374
        %v2503 = vpack.c.b16 %v2375, %v2375
        %v2504 = vpack.c.b16 %v2376, %v2376
        %v2505 = vpack.c.b16 %v2377, %v2377
        %v2506 = vpack.c.b16 %v2378, %v2378
        %v2507 = vpack.c.b16 %v2379, %v2379
        %v2508 = vpack.c.b16 %v2380, %v2380
        %v2509 = vpack.c.b16 %v2381, %v2381
        %v2510 = vpack.c.b16 %v2382, %v2382
        %v2511 = vpack.c.b16 %v2383, %v2383
        %v2512 = vpack.c.b16 %v2384, %v2384
        %v2513 = vpack.c.b16 %v2385, %v2385
        %v2514 = vpack.c.b16 %v2386, %v2386
        %v2515 = vpack.c.b16 %v2387, %v2387
        %v2516 = vpack.c.b16 %v2388, %v2388
        %v2517 = vpack.c.b16 %v2389, %v2389
        %v2518 = vpack.c.b16 %v2390, %v2390
        %v2519 = vpack.c.b16 %v2391, %v2391
        %v2520 = vpack.c.b16 %v2392, %v2392
        %v2521 = vpack.c.b16 %v2393, %v2393
        %v2522 = vpack.c.b16 %v2394, %v2394
        %v2523 = vpack.c.b16 %v2395, %v2395
        %v2524 = vpack.c.b16 %v2396, %v2396
        %v2525 = vpack.c.b16 %v2397, %v2397
        %v2526 = vpack.c.b16 %v2398, %v2398
        %v2527 = vpack.c.b16 %v2399, %v2399
        %v2528 = vpack.c.b16 %v2400, %v2400
        %v2529 = vpack.c.b16 %v2401, %v2401
        %v2530 = vpack.c.b16 %v2402, %v2402
        %v2531 = vpack.c.b16 %v2403, %v2403
        %v2532 = vpack.c.b16 %v2404, %v2404
        %v2533 = vpack.c.b16 %v2405, %v2405
        %v2534 = vpack.c.b16 %v2406, %v2406
        %v2535 = vpack.c.b16 %v2407, %v2407
        %v2536 = vpack.c.b16 %v2408, %v2408
        %v2537 = vpack.c.b16 %v2409, %v2409
        %v2538 = vpack.c.b16 %v2410, %v2410
        %v2539 = vpack.c.b16 %v2411, %v2411
        %v2540 = vpack.c.b16 %v2412, %v2412
        %v2541 = vpack.c.b16 %v2413, %v2413
        %v2542 = vpack.c.b16 %v2414, %v2414
        %v2543 = vpack.c.b16 %v2415, %v2415
        %v2544 = vpack.c.b16 %v2416, %v2416
        %v2545 = vpack.c.b16 %v2417, %v2417
        %v2546 = vpack.c.b16 %v2418, %v2418
        %v2547 = vpack.c.b16 %v2419, %v2419
        %v2548 = vpack.c.b16 %v2420, %v2420
        %v2549 = vpack.c.b16 %v2421, %v2421
        %v2550 = vpack.c.b16 %v2422, %v2422
        %v2551 = vpack.c.b16 %v2423, %v2423
        %v2552 = vpack.c.b16 %v2424, %v2424
        %v2553 = vpack.c.b16 %v2425, %v2425
        %v2554 = vpack.c.b16 %v2426, %v2426
        %v2555 = vpack.c.b16 %v2427, %v2427
        %v2556 = vpack.c.b16 %v2428, %v2428
        %v2557 = vpack.c.b16 %v2429, %v2429
        %v2558 = vpack.c.b16 %v2430, %v2430
        %v2559 = vpack.c.b16 %v2431, %v2431
        %v2560 = vpack.c.b16 %v2432, %v2432
        %v2561 = vpack.c.b16 %v2433, %v2433
        %v2562 = vpack.c.b16 %v2434, %v2434
        %v2563 = vpack.c.b16 %v2435, %v2435
        %v2564 = vpack.c.b16 %v2436, %v2436
        %v2565 = vpack.c.b16 %v2437, %v2437
        %v2566 = vpack.c.b16 %v2438, %v2438
        %v2567 = vpack.c.b16 %v2439, %v2439
        %v2568 = vpack.c.b16 %v2440, %v2440
        %vm2697 = vcmask 519168
        %2698 = vst.msk [vmem:[%s242] sm:$0xf] %vm2697, %v2441
        %2699 = vst.msk [vmem:[%s242 + $0x4] sm:$0xf] %vm2697, %v2442
        %2700 = vst.msk [vmem:[%s242 + $0x8] sm:$0xf] %vm2697, %v2443
        %2701 = vst.msk [vmem:[%s242 + $0xc] sm:$0xf] %vm2697, %v2444
        %2702 = vst.msk [vmem:[%s242 + $0x10] sm:$0xf] %vm2697, %v2445
        %2703 = vst.msk [vmem:[%s242 + $0x14] sm:$0xf] %vm2697, %v2446
        %2704 = vst.msk [vmem:[%s242 + $0x18] sm:$0xf] %vm2697, %v2447
        %2705 = vst.msk [vmem:[%s242 + $0x1c] sm:$0xf] %vm2697, %v2448
        %2706 = vst.msk [vmem:[%s242 + $0x20] sm:$0xf] %vm2697, %v2449
        %2707 = vst.msk [vmem:[%s242 + $0x24] sm:$0xf] %vm2697, %v2450
        %2708 = vst.msk [vmem:[%s242 + $0x28] sm:$0xf] %vm2697, %v2451
        %2709 = vst.msk [vmem:[%s242 + $0x2c] sm:$0xf] %vm2697, %v2452
        %2710 = vst.msk [vmem:[%s242 + $0x30] sm:$0xf] %vm2697, %v2453
        %2711 = vst.msk [vmem:[%s242 + $0x34] sm:$0xf] %vm2697, %v2454
        %2712 = vst.msk [vmem:[%s242 + $0x38] sm:$0xf] %vm2697, %v2455
        %2713 = vst.msk [vmem:[%s242 + $0x3c] sm:$0xf] %vm2697, %v2456
        %2714 = vst.msk [vmem:[%s242 + $0x40] sm:$0xf] %vm2697, %v2457
        %2715 = vst.msk [vmem:[%s242 + $0x44] sm:$0xf] %vm2697, %v2458
        %2716 = vst.msk [vmem:[%s242 + $0x48] sm:$0xf] %vm2697, %v2459
        %2717 = vst.msk [vmem:[%s242 + $0x4c] sm:$0xf] %vm2697, %v2460
        %2718 = vst.msk [vmem:[%s242 + $0x50] sm:$0xf] %vm2697, %v2461
        %2719 = vst.msk [vmem:[%s242 + $0x54] sm:$0xf] %vm2697, %v2462
        %2720 = vst.msk [vmem:[%s242 + $0x58] sm:$0xf] %vm2697, %v2463
        %2721 = vst.msk [vmem:[%s242 + $0x5c] sm:$0xf] %vm2697, %v2464
        %2722 = vst.msk [vmem:[%s242 + $0x60] sm:$0xf] %vm2697, %v2465
        %2723 = vst.msk [vmem:[%s242 + $0x64] sm:$0xf] %vm2697, %v2466
        %2724 = vst.msk [vmem:[%s242 + $0x68] sm:$0xf] %vm2697, %v2467
        %2725 = vst.msk [vmem:[%s242 + $0x6c] sm:$0xf] %vm2697, %v2468
        %2726 = vst.msk [vmem:[%s242 + $0x70] sm:$0xf] %vm2697, %v2469
        %2727 = vst.msk [vmem:[%s242 + $0x74] sm:$0xf] %vm2697, %v2470
        %2728 = vst.msk [vmem:[%s242 + $0x78] sm:$0xf] %vm2697, %v2471
        %2729 = vst.msk [vmem:[%s242 + $0x7c] sm:$0xf] %vm2697, %v2472
        %2730 = vst.msk [vmem:[%s242 + $0x80] sm:$0xf] %vm2697, %v2473
        %2731 = vst.msk [vmem:[%s242 + $0x84] sm:$0xf] %vm2697, %v2474
        %2732 = vst.msk [vmem:[%s242 + $0x88] sm:$0xf] %vm2697, %v2475
        %2733 = vst.msk [vmem:[%s242 + $0x8c] sm:$0xf] %vm2697, %v2476
        %2734 = vst.msk [vmem:[%s242 + $0x90] sm:$0xf] %vm2697, %v2477
        %2735 = vst.msk [vmem:[%s242 + $0x94] sm:$0xf] %vm2697, %v2478
        %2736 = vst.msk [vmem:[%s242 + $0x98] sm:$0xf] %vm2697, %v2479
        %2737 = vst.msk [vmem:[%s242 + $0x9c] sm:$0xf] %vm2697, %v2480
        %2738 = vst.msk [vmem:[%s242 + $0xa0] sm:$0xf] %vm2697, %v2481
        %2739 = vst.msk [vmem:[%s242 + $0xa4] sm:$0xf] %vm2697, %v2482
        %2740 = vst.msk [vmem:[%s242 + $0xa8] sm:$0xf] %vm2697, %v2483
        %2741 = vst.msk [vmem:[%s242 + $0xac] sm:$0xf] %vm2697, %v2484
        %2742 = vst.msk [vmem:[%s242 + $0xb0] sm:$0xf] %vm2697, %v2485
        %2743 = vst.msk [vmem:[%s242 + $0xb4] sm:$0xf] %vm2697, %v2486
        %2744 = vst.msk [vmem:[%s242 + $0xb8] sm:$0xf] %vm2697, %v2487
        %2745 = vst.msk [vmem:[%s242 + $0xbc] sm:$0xf] %vm2697, %v2488
        %2746 = vst.msk [vmem:[%s242 + $0xc0] sm:$0xf] %vm2697, %v2489
        %2747 = vst.msk [vmem:[%s242 + $0xc4] sm:$0xf] %vm2697, %v2490
        %2748 = vst.msk [vmem:[%s242 + $0xc8] sm:$0xf] %vm2697, %v2491
        %2749 = vst.msk [vmem:[%s242 + $0xcc] sm:$0xf] %vm2697, %v2492
        %2750 = vst.msk [vmem:[%s242 + $0xd0] sm:$0xf] %vm2697, %v2493
        %2751 = vst.msk [vmem:[%s242 + $0xd4] sm:$0xf] %vm2697, %v2494
        %2752 = vst.msk [vmem:[%s242 + $0xd8] sm:$0xf] %vm2697, %v2495
        %2753 = vst.msk [vmem:[%s242 + $0xdc] sm:$0xf] %vm2697, %v2496
        %2754 = vst.msk [vmem:[%s242 + $0xe0] sm:$0xf] %vm2697, %v2497
        %2755 = vst.msk [vmem:[%s242 + $0xe4] sm:$0xf] %vm2697, %v2498
        %2756 = vst.msk [vmem:[%s242 + $0xe8] sm:$0xf] %vm2697, %v2499
        %2757 = vst.msk [vmem:[%s242 + $0xec] sm:$0xf] %vm2697, %v2500
        %2758 = vst.msk [vmem:[%s242 + $0xf0] sm:$0xf] %vm2697, %v2501
        %2759 = vst.msk [vmem:[%s242 + $0xf4] sm:$0xf] %vm2697, %v2502
        %2760 = vst.msk [vmem:[%s242 + $0xf8] sm:$0xf] %vm2697, %v2503
        %2761 = vst.msk [vmem:[%s242 + $0xfc] sm:$0xf] %vm2697, %v2504
        %2762 = vst.msk [vmem:[%s242 + $0x100] sm:$0xf] %vm2697, %v2505
        %2763 = vst.msk [vmem:[%s242 + $0x104] sm:$0xf] %vm2697, %v2506
        %2764 = vst.msk [vmem:[%s242 + $0x108] sm:$0xf] %vm2697, %v2507
        %2765 = vst.msk [vmem:[%s242 + $0x10c] sm:$0xf] %vm2697, %v2508
        %2766 = vst.msk [vmem:[%s242 + $0x110] sm:$0xf] %vm2697, %v2509
        %2767 = vst.msk [vmem:[%s242 + $0x114] sm:$0xf] %vm2697, %v2510
        %2768 = vst.msk [vmem:[%s242 + $0x118] sm:$0xf] %vm2697, %v2511
        %2769 = vst.msk [vmem:[%s242 + $0x11c] sm:$0xf] %vm2697, %v2512
        %2770 = vst.msk [vmem:[%s242 + $0x120] sm:$0xf] %vm2697, %v2513
        %2771 = vst.msk [vmem:[%s242 + $0x124] sm:$0xf] %vm2697, %v2514
        %2772 = vst.msk [vmem:[%s242 + $0x128] sm:$0xf] %vm2697, %v2515
        %2773 = vst.msk [vmem:[%s242 + $0x12c] sm:$0xf] %vm2697, %v2516
        %2774 = vst.msk [vmem:[%s242 + $0x130] sm:$0xf] %vm2697, %v2517
        %2775 = vst.msk [vmem:[%s242 + $0x134] sm:$0xf] %vm2697, %v2518
        %2776 = vst.msk [vmem:[%s242 + $0x138] sm:$0xf] %vm2697, %v2519
        %2777 = vst.msk [vmem:[%s242 + $0x13c] sm:$0xf] %vm2697, %v2520
        %2778 = vst.msk [vmem:[%s242 + $0x140] sm:$0xf] %vm2697, %v2521
        %2779 = vst.msk [vmem:[%s242 + $0x144] sm:$0xf] %vm2697, %v2522
        %2780 = vst.msk [vmem:[%s242 + $0x148] sm:$0xf] %vm2697, %v2523
        %2781 = vst.msk [vmem:[%s242 + $0x14c] sm:$0xf] %vm2697, %v2524
        %2782 = vst.msk [vmem:[%s242 + $0x150] sm:$0xf] %vm2697, %v2525
        %2783 = vst.msk [vmem:[%s242 + $0x154] sm:$0xf] %vm2697, %v2526
        %2784 = vst.msk [vmem:[%s242 + $0x158] sm:$0xf] %vm2697, %v2527
        %2785 = vst.msk [vmem:[%s242 + $0x15c] sm:$0xf] %vm2697, %v2528
        %2786 = vst.msk [vmem:[%s242 + $0x160] sm:$0xf] %vm2697, %v2529
        %2787 = vst.msk [vmem:[%s242 + $0x164] sm:$0xf] %vm2697, %v2530
        %2788 = vst.msk [vmem:[%s242 + $0x168] sm:$0xf] %vm2697, %v2531
        %2789 = vst.msk [vmem:[%s242 + $0x16c] sm:$0xf] %vm2697, %v2532
        %2790 = vst.msk [vmem:[%s242 + $0x170] sm:$0xf] %vm2697, %v2533
        %2791 = vst.msk [vmem:[%s242 + $0x174] sm:$0xf] %vm2697, %v2534
        %2792 = vst.msk [vmem:[%s242 + $0x178] sm:$0xf] %vm2697, %v2535
        %2793 = vst.msk [vmem:[%s242 + $0x17c] sm:$0xf] %vm2697, %v2536
        %2794 = vst.msk [vmem:[%s242 + $0x180] sm:$0xf] %vm2697, %v2537
        %2795 = vst.msk [vmem:[%s242 + $0x184] sm:$0xf] %vm2697, %v2538
        %2796 = vst.msk [vmem:[%s242 + $0x188] sm:$0xf] %vm2697, %v2539
        %2797 = vst.msk [vmem:[%s242 + $0x18c] sm:$0xf] %vm2697, %v2540
        %2798 = vst.msk [vmem:[%s242 + $0x190] sm:$0xf] %vm2697, %v2541
        %2799 = vst.msk [vmem:[%s242 + $0x194] sm:$0xf] %vm2697, %v2542
        %2800 = vst.msk [vmem:[%s242 + $0x198] sm:$0xf] %vm2697, %v2543
        %2801 = vst.msk [vmem:[%s242 + $0x19c] sm:$0xf] %vm2697, %v2544
        %2802 = vst.msk [vmem:[%s242 + $0x1a0] sm:$0xf] %vm2697, %v2545
        %2803 = vst.msk [vmem:[%s242 + $0x1a4] sm:$0xf] %vm2697, %v2546
        %2804 = vst.msk [vmem:[%s242 + $0x1a8] sm:$0xf] %vm2697, %v2547
        %2805 = vst.msk [vmem:[%s242 + $0x1ac] sm:$0xf] %vm2697, %v2548
        %2806 = vst.msk [vmem:[%s242 + $0x1b0] sm:$0xf] %vm2697, %v2549
        %2807 = vst.msk [vmem:[%s242 + $0x1b4] sm:$0xf] %vm2697, %v2550
        %2808 = vst.msk [vmem:[%s242 + $0x1b8] sm:$0xf] %vm2697, %v2551
        %2809 = vst.msk [vmem:[%s242 + $0x1bc] sm:$0xf] %vm2697, %v2552
        %2810 = vst.msk [vmem:[%s242 + $0x1c0] sm:$0xf] %vm2697, %v2553
        %2811 = vst.msk [vmem:[%s242 + $0x1c4] sm:$0xf] %vm2697, %v2554
        %2812 = vst.msk [vmem:[%s242 + $0x1c8] sm:$0xf] %vm2697, %v2555
        %2813 = vst.msk [vmem:[%s242 + $0x1cc] sm:$0xf] %vm2697, %v2556
        %2814 = vst.msk [vmem:[%s242 + $0x1d0] sm:$0xf] %vm2697, %v2557
        %2815 = vst.msk [vmem:[%s242 + $0x1d4] sm:$0xf] %vm2697, %v2558
        %2816 = vst.msk [vmem:[%s242 + $0x1d8] sm:$0xf] %vm2697, %v2559
        %2817 = vst.msk [vmem:[%s242 + $0x1dc] sm:$0xf] %vm2697, %v2560
        %2818 = vst.msk [vmem:[%s242 + $0x1e0] sm:$0xf] %vm2697, %v2561
        %2819 = vst.msk [vmem:[%s242 + $0x1e4] sm:$0xf] %vm2697, %v2562
        %2820 = vst.msk [vmem:[%s242 + $0x1e8] sm:$0xf] %vm2697, %v2563
        %2821 = vst.msk [vmem:[%s242 + $0x1ec] sm:$0xf] %vm2697, %v2564
        %2822 = vst.msk [vmem:[%s242 + $0x1f0] sm:$0xf] %vm2697, %v2565
        %2823 = vst.msk [vmem:[%s242 + $0x1f4] sm:$0xf] %vm2697, %v2566
        %2824 = vst.msk [vmem:[%s242 + $0x1f8] sm:$0xf] %vm2697, %v2567
        %2825 = vst.msk [vmem:[%s242 + $0x1fc] sm:$0xf] %vm2697, %v2568
        %s2826 = sand.u32 %s144, 1
        %s2827 = scalar_lea.sflag [#allocation3], %s2826
        %s2828 = sand.u32 %s144, 1
        %s2829 = smul.addr %s2828, 512
        %s2830 = scalar_lea.vmem [#allocation2], %s2829
        // Predicated region
        $region37: #{conv_im2col_bn_act.1} parent=35 // pred_check
          %p2831 = pneg %p154
        $region38: #{conv_im2col_bn_act.1} parent=35 // pred_check_branch
          %2833 = sbr.rel (%p2831) target = $region40
        $region39: #{conv_im2col_bn_act.1} parent=35 // pred_region
          %s2834 = smul.u32 128, %s23
          %s2836 = ssub.s32 8192, 8192
          %2837 = vsyncadd %s2827, %s2836
          %s2838 = sadd.s32 %s22, %s2834
          %s2839 = smul.addr %s2838, 64
          %s2840 = scalar_lea.hbm %s4, %s2839
          %s2841 = sshll.u32 %s2830, 4
          %s2842 = int_to_ptr.vmem [resolvable:$true] %s2841
          %2847 = dma.vmem_to_hbm [thread:$0]  %s2842, 8192, %s2840, %s2827, 64, 64, 4
        $region40: #{conv_im2col_bn_act.1} parent=35 // pred_fallthru
          _
      $region36: #{conv_im2col_bn_act.1} parent=5 // pred_fallthru
        _
      %p2848 = scmp.le.s32.totalorder 2, %s13
      // Predicated region
      $region41: #{conv_im2col_bn_act.1} parent=5 // pred_check
        %p2849 = pneg %p2848
      $region42: #{conv_im2col_bn_act.1} parent=5 // pred_check_branch
        %2851 = sbr.rel (%p2849) target = $region44
      $region43: #{conv_im2col_bn_act.1} parent=5 // pred_region
        %s2852 = ssub.s32 %s13, 2
        // Predicated region
        $region45: #{conv_im2col_bn_act.1} parent=43 // pred_check
          %p2853 = pneg %p160
        $region46: #{conv_im2col_bn_act.1} parent=43 // pred_check_branch
          %2855 = sbr.rel (%p2853) target = $region48
        $region47: #{conv_im2col_bn_act.1} parent=43 // pred_region
          %s2856 = sand.u32 %s145, 1
          %s2857 = scalar_lea.sflag [#allocation3], %s2856
          %s2858 = sand.u32 %s145, 1
          %s2859 = smul.addr %s2858, 512
          %s2860 = scalar_lea.vmem [#allocation2], %s2859
          %2861 = dma.done %s2857, 8192
        $region48: #{conv_im2col_bn_act.1} parent=43 // pred_fallthru
          _
      $region44: #{conv_im2col_bn_act.1} parent=5 // pred_fallthru
        _
    $region6: #{conv_im2col_bn_act.1} parent=1 // loop_footer
      %s17 = sadd.s32 1, %s13
    $region7: #{conv_im2col_bn_act.1} parent=1 // loop_footer_branch
      %12 = sbr.rel target = $region3
    $region8: #{conv_im2col_bn_act.1} parent=1 // loop_exit
      _
    %2862 = vsyncpa [#allocation3], 1
    %s2863 = scalar_lea.sflag [#allocation3], 1
    %2864 = vsyncpa %s2863, 1

</llo_original>
